<compile_context>
chip_gen: v7x
topology: tpu7x:2x2x1
jax: 0.10.0
libtpu: 0.0.40
codegen_flags: <defaults>
</compile_context>

<pallas_src>
import jax
import jax.numpy as jnp
from jax.experimental import pallas as pl
from jax.experimental.pallas import tpu as pltpu

EPS = 1e-5
LANE = 128
VMEM_BUDGET = 48 << 20   # conservative across v5e/v6e/v7x (v7x physical = 64 MiB)


def _make_kernel(n_rows, tb):
    """Kernel factory: closes over the true batch size and the batch tile."""
    inv_n = 1.0 / float(n_rows)

    def kernel(x_ref, w1_ref, g1_ref, be1_ref,
               w2_ref, g2_ref, be2_ref, w3_ref, b3_ref,
               o_ref, h1_ref, s_ref, ss_ref):
        i = pl.program_id(0)

        @pl.when(i == 0)
        def _init():
            s_ref[...] = jnp.zeros_like(s_ref)
            ss_ref[...] = jnp.zeros_like(ss_ref)

        # ---- Layer 1 on this batch tile: bf16 MXU matmul, f32 accumulation.
        # Pre-BN bias is dropped (train-mode BN absorbs it exactly).
        x = x_ref[...].astype(jnp.bfloat16)
        h = jnp.dot(x, w1_ref[...], preferred_element_type=jnp.float32)  # (tb,512)
        s_ref[...] += jnp.sum(h, axis=0, keepdims=True)
        ss_ref[...] += jnp.sum(h * h, axis=0, keepdims=True)
        h1_ref[pl.ds(pl.multiple_of(i * tb, tb), tb), :] = h

        @pl.when(i == pl.num_programs(0) - 1)
        def _epilogue():
            b_pad = h1_ref.shape[0]

            # ---- BN-1 folded into a single scale/shift, then ReLU.
            mu = s_ref[...] * inv_n
            var = jnp.maximum(ss_ref[...] * inv_n - mu * mu, 0.0)
            sc1 = g1_ref[...] * jax.lax.rsqrt(var + EPS)
            sh1 = be1_ref[...] - mu * sc1
            h1 = jnp.maximum(h1_ref[...] * sc1 + sh1, 0.0)
            if b_pad > n_rows:
                # Zero padded rows so BN-2 sums (divided by n_rows) stay exact.
                row = jax.lax.broadcasted_iota(jnp.int32, (b_pad, 1), 0)
                h1 = jnp.where(row < n_rows, h1, 0.0)
            h1 = h1.astype(jnp.bfloat16)

            # ---- Layer 2 (512 -> 128 lane-padded) + BN-2 + ReLU.
            h2 = jnp.dot(h1, w2_ref[...], preferred_element_type=jnp.float32)
            mu2 = jnp.sum(h2, axis=0, keepdims=True) * inv_n
            var2 = jnp.maximum(
                jnp.sum(h2 * h2, axis=0, keepdims=True) * inv_n - mu2 * mu2, 0.0)
            sc2 = g2_ref[...] * jax.lax.rsqrt(var2 + EPS)
            sh2 = be2_ref[...] - mu2 * sc2
            h2 = jnp.maximum(h2 * sc2 + sh2, 0.0).astype(jnp.bfloat16)

            # ---- Layer 3 (128 -> n_pad), lane-dense store.
            out = jnp.dot(h2, w3_ref[...], preferred_element_type=jnp.float32)
            o_ref[...] = (out + b3_ref[...]).astype(o_ref.dtype)

    return kernel


def parametric_func_forward(x, params):
    """x: (B, 1280) float32 or bfloat16. Returns (B, n_way) float32."""
    B, f_in = x.shape
    assert f_in == 1280
    n_way = params["n_way"]
    n_pad = params["w3"].shape[1]      # lane-padded head width  (multiple of 128)
    h2w = params["w2"].shape[1]        # lane-padded hidden width (= 128)

    # Batch tiling: stream x in (tb, 1280) tiles; BN statistics accumulate in
    # VMEM scratch and the normalize + layers 2/3 run in the last-tile epilogue.
    b8 = ((B + 7) // 8) * 8
    tb = min(256, b8)
    b_pad = ((b8 + tb - 1) // tb) * tb
    nbt = b_pad // tb
    if b_pad != B:
        x = jnp.pad(x, ((0, b_pad - B), (0, 0)))   # zero rows: no effect on BN sums

    # Honest VMEM footprint estimate (bytes), asserted against a budget that
    # fits every generation; passed to Mosaic as the scoped-VMEM limit.
    isz = x.dtype.itemsize
    est = (2 * tb * 1280 * isz                                   # double-buffered x tile
           + (1280 * 512 + 512 * h2w + h2w * n_pad) * 2          # bf16 weights
           + b_pad * 512 * 4 + 2 * 512 * 4                       # h1 scratch + BN sums
           + b_pad * n_pad * 4                                   # resident output block
           + b_pad * (512 + h2w) * 6)                            # epilogue temporaries
    vmem_need = 2 * est                                          # headroom for Mosaic buffering
    assert vmem_need <= VMEM_BUDGET, (
        f"batch {B} needs ~{vmem_need >> 20} MiB VMEM (> {VMEM_BUDGET >> 20} MiB budget); "
        "reduce the batch or stream layers 2/3 as well")
    vmem_limit = max(vmem_need, 32 << 20)

    cost = pl.CostEstimate(
        flops=2 * b_pad * (1280 * 512 + 512 * h2w + h2w * n_pad),
        transcendentals=512 + h2w,
        bytes_accessed=int(x.size * isz
                           + (1280 * 512 + 512 * h2w + h2w * n_pad) * 2
                           + b_pad * n_pad * 4),
    )

    out = pl.pallas_call(
        _make_kernel(n_rows=B, tb=tb),
        out_shape=jax.ShapeDtypeStruct((b_pad, n_pad), jnp.float32),
        grid_spec=pltpu.PrefetchScalarGridSpec(
            num_scalar_prefetch=0,
            grid=(nbt,),
            in_specs=[
                pl.BlockSpec((tb, 1280), lambda i: (i, 0)),     # x: batch-tiled, pipelined
                pl.BlockSpec((1280, 512), lambda i: (0, 0)),    # w1 (resident)
                pl.BlockSpec((1, 512), lambda i: (0, 0)),       # g1
                pl.BlockSpec((1, 512), lambda i: (0, 0)),       # be1
                pl.BlockSpec((512, h2w), lambda i: (0, 0)),     # w2 (64 -> 128 padded)
                pl.BlockSpec((1, h2w), lambda i: (0, 0)),       # g2
                pl.BlockSpec((1, h2w), lambda i: (0, 0)),       # be2
                pl.BlockSpec((h2w, n_pad), lambda i: (0, 0)),   # w3 (padded both ways)
                pl.BlockSpec((1, n_pad), lambda i: (0, 0)),     # b3
            ],
            out_specs=pl.BlockSpec((b_pad, n_pad), lambda i: (0, 0)),
            scratch_shapes=[
                pltpu.VMEM((b_pad, 512), jnp.float32),   # pre-BN h1 (persists across tiles)
                pltpu.VMEM((1, 512), jnp.float32),       # BN-1 sum
                pltpu.VMEM((1, 512), jnp.float32),       # BN-1 sum of squares
            ]),
        compiler_params=pltpu.CompilerParams(
            dimension_semantics=("arbitrary",),          # accumulator + resident output
            vmem_limit_bytes=int(vmem_limit)),
        cost_estimate=cost,
    )(x, params["w1"], params["g1"], params["be1"],
      params["w2"], params["g2"], params["be2"],
      params["w3"], params["b3"])

    return out[:B, :n_way]


def init_params(key, n_way):
    """Kernel params (padded, bf16 weights) + raw f32 params for the reference."""
    ks = jax.random.split(key, 6)
    n_pad = ((n_way + LANE - 1) // LANE) * LANE

    def lin(kw, kb, fan_in, fan_out):
        bound = 1.0 / (fan_in ** 0.5)
        w = jax.random.uniform(kw, (fan_in, fan_out), jnp.float32, -bound, bound)
        b = jax.random.uniform(kb, (1, fan_out), jnp.float32, -bound, bound)
        return w, b

    w1, b1 = lin(ks[0], ks[1], 1280, 512)
    w2, b2 = lin(ks[2], ks[3], 512, 64)
    w3, b3 = lin(ks[4], ks[5], 64, n_way)

    raw = dict(w1=w1, b1=b1, w2=w2, b2=b2, w3=w3, b3=b3,
               g1=jnp.ones((1, 512), jnp.float32), be1=jnp.zeros((1, 512), jnp.float32),
               g2=jnp.ones((1, 64), jnp.float32), be2=jnp.zeros((1, 64), jnp.float32))

    # Lane-pad layer 2 (64 -> 128) and the head (n_way -> n_pad); padded columns
    # stay exactly 0 through BN (beta=0, no pre-BN bias) and ReLU.
    w2p = jnp.zeros((512, 128), jnp.float32).at[:, :64].set(w2)
    g2p = jnp.ones((1, 128), jnp.float32)
    be2p = jnp.zeros((1, 128), jnp.float32)
    w3p = jnp.zeros((128, n_pad), jnp.float32).at[:64, :n_way].set(w3)
    b3p = jnp.zeros((1, n_pad), jnp.float32).at[:, :n_way].set(b3)

    kernel_params = dict(
        n_way=n_way,
        w1=w1.astype(jnp.bfloat16), g1=raw["g1"], be1=raw["be1"],
        w2=w2p.astype(jnp.bfloat16), g2=g2p, be2=be2p,
        w3=w3p.astype(jnp.bfloat16), b3=b3p,
    )
    return kernel_params, raw


def _reference(x, raw):
    """Pure-JAX reference mirroring the PyTorch module (with biases, two-pass BN)."""
    def mm(a, w):
        return jnp.dot(a.astype(jnp.bfloat16), w.astype(jnp.bfloat16),
                       preferred_element_type=jnp.float32)

    def bn_relu(h, g, be):
        mu = h.mean(0, keepdims=True)
        var = ((h - mu) ** 2).mean(0, keepdims=True)
        return jnp.maximum((h - mu) * jax.lax.rsqrt(var + EPS) * g + be, 0.0)

    h = bn_relu(mm(x, raw["w1"]) + raw["b1"], raw["g1"], raw["be1"])
    h = bn_relu(mm(h, raw["w2"]) + raw["b2"], raw["g2"], raw["be2"])
    return mm(h, raw["w3"]) + raw["b3"]


if __name__ == "__main__":
    key = jax.random.PRNGKey(0)
    k_x, k_p = jax.random.split(key)

    B, n_way = 8, 5
    x = jax.random.normal(k_x, (B, 1280), jnp.float32)
    params, raw = init_params(k_p, n_way)

    out = parametric_func_forward(x, params)
    out = jax.block_until_ready(out)

    ref = _reference(x, raw)
    assert out.shape == (B, n_way), out.shape
    max_err = float(jnp.max(jnp.abs(out - ref)))
    assert jnp.allclose(out, ref, atol=1e-2, rtol=1e-2), max_err

    print("KERNEL_OK")
</pallas_src>

<mosaic_0001>
module attributes {stable_mosaic.version = 11 : i64} {
  func.func @kernel(%arg0: i32, %arg1: memref<8x1280xf32, #tpu.memory_space<vmem>>, %arg2: memref<1280x512xbf16, #tpu.memory_space<vmem>>, %arg3: memref<1x512xf32, #tpu.memory_space<vmem>>, %arg4: memref<1x512xf32, #tpu.memory_space<vmem>>, %arg5: memref<512x128xbf16, #tpu.memory_space<vmem>>, %arg6: memref<1x128xf32, #tpu.memory_space<vmem>>, %arg7: memref<1x128xf32, #tpu.memory_space<vmem>>, %arg8: memref<128x128xbf16, #tpu.memory_space<vmem>>, %arg9: memref<1x128xf32, #tpu.memory_space<vmem>>, %arg10: memref<8x128xf32, #tpu.memory_space<vmem>>, %arg11: memref<8x512xf32, #tpu.memory_space<vmem>>, %arg12: memref<1x512xf32, #tpu.memory_space<vmem>>, %arg13: memref<1x512xf32, #tpu.memory_space<vmem>>) attributes {dimension_semantics = [#tpu.dimension_semantics<arbitrary>], iteration_bounds = array<i64: 1>, scalar_prefetch = 0 : i64, scratch_operands = 3 : i64, tpu.core_type = #tpu.core_type<tc>, window_params = [{transform_indices = @transform_0, window_bounds = array<i64: 8, 1280>}, {pipeline_mode = #tpu.pipeline_mode<synchronous>, transform_indices = @transform_1, window_bounds = array<i64: 1280, 512>}, {pipeline_mode = #tpu.pipeline_mode<synchronous>, transform_indices = @transform_2, window_bounds = array<i64: 1, 512>}, {pipeline_mode = #tpu.pipeline_mode<synchronous>, transform_indices = @transform_3, window_bounds = array<i64: 1, 512>}, {pipeline_mode = #tpu.pipeline_mode<synchronous>, transform_indices = @transform_4, window_bounds = array<i64: 512, 128>}, {pipeline_mode = #tpu.pipeline_mode<synchronous>, transform_indices = @transform_5, window_bounds = array<i64: 1, 128>}, {pipeline_mode = #tpu.pipeline_mode<synchronous>, transform_indices = @transform_6, window_bounds = array<i64: 1, 128>}, {pipeline_mode = #tpu.pipeline_mode<synchronous>, transform_indices = @transform_7, window_bounds = array<i64: 128, 128>}, {pipeline_mode = #tpu.pipeline_mode<synchronous>, transform_indices = @transform_8, window_bounds = array<i64: 1, 128>}, {pipeline_mode = #tpu.pipeline_mode<synchronous>, transform_indices = @transform_9, window_bounds = array<i64: 8, 128>}]} {
    %c0_i32 = arith.constant 0 : i32
    %0 = arith.cmpi eq, %arg0, %c0_i32 : i32
    %1 = arith.extui %0 : i1 to i32
    %c0_i32_0 = arith.constant 0 : i32
    %2 = arith.cmpi ne, %1, %c0_i32_0 : i32
    scf.if %2 {
      %cst_17 = arith.constant 0.000000e+00 : f32
      %25 = vector.broadcast %cst_17 : f32 to vector<1x512xf32>
      %c0_18 = arith.constant 0 : index
      %c0_19 = arith.constant 0 : index
      %26 = vector.load %arg12[%c0_18, %c0_19] : memref<1x512xf32, #tpu.memory_space<vmem>>, vector<1x512xf32>
      tpu.vector_store %arg12[%c0_18, %c0_19], %25 {strides = array<i32>} : memref<1x512xf32, #tpu.memory_space<vmem>>, vector<1x512xf32>,
      %cst_20 = arith.constant 0.000000e+00 : f32
      %27 = vector.broadcast %cst_20 : f32 to vector<1x512xf32>
      %c0_21 = arith.constant 0 : index
      %c0_22 = arith.constant 0 : index
      %28 = vector.load %arg13[%c0_21, %c0_22] : memref<1x512xf32, #tpu.memory_space<vmem>>, vector<1x512xf32>
      tpu.vector_store %arg13[%c0_21, %c0_22], %27 {strides = array<i32>} : memref<1x512xf32, #tpu.memory_space<vmem>>, vector<1x512xf32>,
    } else {
    }
    %c0 = arith.constant 0 : index
    %c0_1 = arith.constant 0 : index
    %3 = vector.load %arg1[%c0, %c0_1] : memref<8x1280xf32, #tpu.memory_space<vmem>>, vector<8x1280xf32>
    %4 = arith.truncf %3 : vector<8x1280xf32> to vector<8x1280xbf16>
    %c0_2 = arith.constant 0 : index
    %c0_3 = arith.constant 0 : index
    %5 = vector.load %arg2[%c0_2, %c0_3] : memref<1280x512xbf16, #tpu.memory_space<vmem>>, vector<1280x512xbf16>
    %cst = arith.constant dense<0.000000e+00> : vector<8x512xf32>
    %6 = tpu.matmul %4, %5, %cst {dimension_numbers = #tpu.dot_dimension_numbers<[1], [0], [0], [1], [0, 0, 1, 1], [], []>} : vector<8x1280xbf16>, vector<1280x512xbf16>, vector<8x512xf32> -> vector<8x512xf32>
    %c0_4 = arith.constant 0 : index
    %c0_5 = arith.constant 0 : index
    %7 = vector.load %arg12[%c0_4, %c0_5] : memref<1x512xf32, #tpu.memory_space<vmem>>, vector<1x512xf32>
    %cst_6 = arith.constant dense<0.000000e+00> : vector<512xf32>
    %8 = vector.multi_reduction <add>, %6, %cst_6 [0] : vector<8x512xf32> to vector<512xf32>
    %9 = vector.shape_cast %8 : vector<512xf32> to vector<1x512xf32>
    %10 = arith.addf %7, %9 : vector<1x512xf32>
    %c0_7 = arith.constant 0 : index
    %c0_8 = arith.constant 0 : index
    %11 = vector.load %arg12[%c0_7, %c0_8] : memref<1x512xf32, #tpu.memory_space<vmem>>, vector<1x512xf32>
    tpu.vector_store %arg12[%c0_7, %c0_8], %10 {strides = array<i32>} : memref<1x512xf32, #tpu.memory_space<vmem>>, vector<1x512xf32>,
    %c0_9 = arith.constant 0 : index
    %c0_10 = arith.constant 0 : index
    %12 = vector.load %arg13[%c0_9, %c0_10] : memref<1x512xf32, #tpu.memory_space<vmem>>, vector<1x512xf32>
    %13 = arith.mulf %6, %6 : vector<8x512xf32>
    %cst_11 = arith.constant dense<0.000000e+00> : vector<512xf32>
    %14 = vector.multi_reduction <add>, %13, %cst_11 [0] : vector<8x512xf32> to vector<512xf32>
    %15 = vector.shape_cast %14 : vector<512xf32> to vector<1x512xf32>
    %16 = arith.addf %12, %15 : vector<1x512xf32>
    %c0_12 = arith.constant 0 : index
    %c0_13 = arith.constant 0 : index
    %17 = vector.load %arg13[%c0_12, %c0_13] : memref<1x512xf32, #tpu.memory_space<vmem>>, vector<1x512xf32>
    tpu.vector_store %arg13[%c0_12, %c0_13], %16 {strides = array<i32>} : memref<1x512xf32, #tpu.memory_space<vmem>>, vector<1x512xf32>,
    %c8_i32 = arith.constant 8 : i32
    %18 = arith.muli %arg0, %c8_i32 : i32
    %19 = tpu.assume_multiple %18, 8 : i32
    %20 = arith.index_cast %19 : i32 to index
    %c0_14 = arith.constant 0 : index
    %21 = vector.load %arg11[%20, %c0_14] : memref<8x512xf32, #tpu.memory_space<vmem>>, vector<8x512xf32>
    tpu.vector_store %arg11[%20, %c0_14], %6 {strides = array<i32>} : memref<8x512xf32, #tpu.memory_space<vmem>>, vector<8x512xf32>,
    %c0_i32_15 = arith.constant 0 : i32
    %22 = arith.cmpi eq, %arg0, %c0_i32_15 : i32
    %23 = arith.extui %22 : i1 to i32
    %c0_i32_16 = arith.constant 0 : i32
    %24 = arith.cmpi ne, %23, %c0_i32_16 : i32
    scf.if %24 {
      %c0_17 = arith.constant 0 : index
      %c0_18 = arith.constant 0 : index
      %25 = vector.load %arg12[%c0_17, %c0_18] : memref<1x512xf32, #tpu.memory_space<vmem>>, vector<1x512xf32>
      %cst_19 = arith.constant 1.250000e-01 : f32
      %26 = vector.broadcast %cst_19 : f32 to vector<1x512xf32>
      %27 = arith.mulf %25, %26 : vector<1x512xf32>
      %c0_20 = arith.constant 0 : index
      %c0_21 = arith.constant 0 : index
      %28 = vector.load %arg13[%c0_20, %c0_21] : memref<1x512xf32, #tpu.memory_space<vmem>>, vector<1x512xf32>
      %cst_22 = arith.constant 1.250000e-01 : f32
      %29 = vector.broadcast %cst_22 : f32 to vector<1x512xf32>
      %30 = arith.mulf %28, %29 : vector<1x512xf32>
      %31 = arith.mulf %27, %27 : vector<1x512xf32>
      %32 = arith.subf %30, %31 : vector<1x512xf32>
      %cst_23 = arith.constant 0.000000e+00 : f32
      %33 = vector.broadcast %cst_23 : f32 to vector<1x512xf32>
      %34 = arith.maximumf %32, %33 : vector<1x512xf32>
      %c0_24 = arith.constant 0 : index
      %c0_25 = arith.constant 0 : index
      %35 = vector.load %arg3[%c0_24, %c0_25] : memref<1x512xf32, #tpu.memory_space<vmem>>, vector<1x512xf32>
      %cst_26 = arith.constant 9.99999974E-6 : f32
      %36 = vector.broadcast %cst_26 : f32 to vector<1x512xf32>
      %37 = arith.addf %34, %36 : vector<1x512xf32>
      %38 = math.rsqrt %37 : vector<1x512xf32>
      %39 = arith.mulf %35, %38 : vector<1x512xf32>
      %c0_27 = arith.constant 0 : index
      %c0_28 = arith.constant 0 : index
      %40 = vector.load %arg4[%c0_27, %c0_28] : memref<1x512xf32, #tpu.memory_space<vmem>>, vector<1x512xf32>
      %41 = arith.mulf %27, %39 : vector<1x512xf32>
      %42 = arith.subf %40, %41 : vector<1x512xf32>
      %c0_29 = arith.constant 0 : index
      %c0_30 = arith.constant 0 : index
      %43 = vector.load %arg11[%c0_29, %c0_30] : memref<8x512xf32, #tpu.memory_space<vmem>>, vector<8x512xf32>
      %44 = vector.broadcast %39 : vector<1x512xf32> to vector<8x512xf32>
      %45 = arith.mulf %43, %44 : vector<8x512xf32>
      %46 = vector.broadcast %42 : vector<1x512xf32> to vector<8x512xf32>
      %47 = arith.addf %45, %46 : vector<8x512xf32>
      %cst_31 = arith.constant 0.000000e+00 : f32
      %48 = vector.broadcast %cst_31 : f32 to vector<8x512xf32>
      %49 = arith.maximumf %47, %48 : vector<8x512xf32>
      %50 = arith.truncf %49 : vector<8x512xf32> to vector<8x512xbf16>
      %c0_32 = arith.constant 0 : index
      %c0_33 = arith.constant 0 : index
      %51 = vector.load %arg5[%c0_32, %c0_33] : memref<512x128xbf16, #tpu.memory_space<vmem>>, vector<512x128xbf16>
      %cst_34 = arith.constant dense<0.000000e+00> : vector<8x128xf32>
      %52 = tpu.matmul %50, %51, %cst_34 {dimension_numbers = #tpu.dot_dimension_numbers<[1], [0], [0], [1], [0, 0, 1, 1], [], []>} : vector<8x512xbf16>, vector<512x128xbf16>, vector<8x128xf32> -> vector<8x128xf32>
      %cst_35 = arith.constant dense<0.000000e+00> : vector<128xf32>
      %53 = vector.multi_reduction <add>, %52, %cst_35 [0] : vector<8x128xf32> to vector<128xf32>
      %54 = vector.shape_cast %53 : vector<128xf32> to vector<1x128xf32>
      %cst_36 = arith.constant 1.250000e-01 : f32
      %55 = vector.broadcast %cst_36 : f32 to vector<1x128xf32>
      %56 = arith.mulf %54, %55 : vector<1x128xf32>
      %57 = arith.mulf %52, %52 : vector<8x128xf32>
      %cst_37 = arith.constant dense<0.000000e+00> : vector<128xf32>
      %58 = vector.multi_reduction <add>, %57, %cst_37 [0] : vector<8x128xf32> to vector<128xf32>
      %59 = vector.shape_cast %58 : vector<128xf32> to vector<1x128xf32>
      %cst_38 = arith.constant 1.250000e-01 : f32
      %60 = vector.broadcast %cst_38 : f32 to vector<1x128xf32>
      %61 = arith.mulf %59, %60 : vector<1x128xf32>
      %62 = arith.mulf %56, %56 : vector<1x128xf32>
      %63 = arith.subf %61, %62 : vector<1x128xf32>
      %cst_39 = arith.constant 0.000000e+00 : f32
      %64 = vector.broadcast %cst_39 : f32 to vector<1x128xf32>
      %65 = arith.maximumf %63, %64 : vector<1x128xf32>
      %c0_40 = arith.constant 0 : index
      %c0_41 = arith.constant 0 : index
      %66 = vector.load %arg6[%c0_40, %c0_41] : memref<1x128xf32, #tpu.memory_space<vmem>>, vector<1x128xf32>
      %cst_42 = arith.constant 9.99999974E-6 : f32
      %67 = vector.broadcast %cst_42 : f32 to vector<1x128xf32>
      %68 = arith.addf %65, %67 : vector<1x128xf32>
      %69 = math.rsqrt %68 : vector<1x128xf32>
      %70 = arith.mulf %66, %69 : vector<1x128xf32>
      %c0_43 = arith.constant 0 : index
      %c0_44 = arith.constant 0 : index
      %71 = vector.load %arg7[%c0_43, %c0_44] : memref<1x128xf32, #tpu.memory_space<vmem>>, vector<1x128xf32>
      %72 = arith.mulf %56, %70 : vector<1x128xf32>
      %73 = arith.subf %71, %72 : vector<1x128xf32>
      %74 = vector.broadcast %70 : vector<1x128xf32> to vector<8x128xf32>
      %75 = arith.mulf %52, %74 : vector<8x128xf32>
      %76 = vector.broadcast %73 : vector<1x128xf32> to vector<8x128xf32>
      %77 = arith.addf %75, %76 : vector<8x128xf32>
      %cst_45 = arith.constant 0.000000e+00 : f32
      %78 = vector.broadcast %cst_45 : f32 to vector<8x128xf32>
      %79 = arith.maximumf %77, %78 : vector<8x128xf32>
      %80 = arith.truncf %79 : vector<8x128xf32> to vector<8x128xbf16>
      %c0_46 = arith.constant 0 : index
      %c0_47 = arith.constant 0 : index
      %81 = vector.load %arg8[%c0_46, %c0_47] : memref<128x128xbf16, #tpu.memory_space<vmem>>, vector<128x128xbf16>
      %cst_48 = arith.constant dense<0.000000e+00> : vector<8x128xf32>
      %82 = tpu.matmul %80, %81, %cst_48 {dimension_numbers = #tpu.dot_dimension_numbers<[1], [0], [0], [1], [0, 0, 1, 1], [], []>} : vector<8x128xbf16>, vector<128x128xbf16>, vector<8x128xf32> -> vector<8x128xf32>
      %c0_49 = arith.constant 0 : index
      %c0_50 = arith.constant 0 : index
      %83 = vector.load %arg9[%c0_49, %c0_50] : memref<1x128xf32, #tpu.memory_space<vmem>>, vector<1x128xf32>
      %84 = vector.broadcast %83 : vector<1x128xf32> to vector<8x128xf32>
      %85 = arith.addf %82, %84 : vector<8x128xf32>
      %c0_51 = arith.constant 0 : index
      %c0_52 = arith.constant 0 : index
      %86 = vector.load %arg10[%c0_51, %c0_52] : memref<8x128xf32, #tpu.memory_space<vmem>>, vector<8x128xf32>
      tpu.vector_store %arg10[%c0_51, %c0_52], %85 {strides = array<i32>} : memref<8x128xf32, #tpu.memory_space<vmem>>, vector<8x128xf32>,
    } else {
    }
    return
  }
  func.func @transform_0(%arg0: i32) -> (i32, i32) {
    %c0_i32 = arith.constant 0 : i32
    %c0_i32_0 = arith.constant 0 : i32
    return %arg0, %c0_i32 : i32, i32
  }
  func.func @transform_1(%arg0: i32) -> (i32, i32) {
    %c0_i32 = arith.constant 0 : i32
    %c0_i32_0 = arith.constant 0 : i32
    %c0_i32_1 = arith.constant 0 : i32
    return %c0_i32, %c0_i32_0 : i32, i32
  }
  func.func @transform_2(%arg0: i32) -> (i32, i32) {
    %c0_i32 = arith.constant 0 : i32
    %c0_i32_0 = arith.constant 0 : i32
    %c0_i32_1 = arith.constant 0 : i32
    return %c0_i32, %c0_i32_0 : i32, i32
  }
  func.func @transform_3(%arg0: i32) -> (i32, i32) {
    %c0_i32 = arith.constant 0 : i32
    %c0_i32_0 = arith.constant 0 : i32
    %c0_i32_1 = arith.constant 0 : i32
    return %c0_i32, %c0_i32_0 : i32, i32
  }
  func.func @transform_4(%arg0: i32) -> (i32, i32) {
    %c0_i32 = arith.constant 0 : i32
    %c0_i32_0 = arith.constant 0 : i32
    %c0_i32_1 = arith.constant 0 : i32
    return %c0_i32, %c0_i32_0 : i32, i32
  }
  func.func @transform_5(%arg0: i32) -> (i32, i32) {
    %c0_i32 = arith.constant 0 : i32
    %c0_i32_0 = arith.constant 0 : i32
    %c0_i32_1 = arith.constant 0 : i32
    return %c0_i32, %c0_i32_0 : i32, i32
  }
  func.func @transform_6(%arg0: i32) -> (i32, i32) {
    %c0_i32 = arith.constant 0 : i32
    %c0_i32_0 = arith.constant 0 : i32
    %c0_i32_1 = arith.constant 0 : i32
    return %c0_i32, %c0_i32_0 : i32, i32
  }
  func.func @transform_7(%arg0: i32) -> (i32, i32) {
    %c0_i32 = arith.constant 0 : i32
    %c0_i32_0 = arith.constant 0 : i32
    %c0_i32_1 = arith.constant 0 : i32
    return %c0_i32, %c0_i32_0 : i32, i32
  }
  func.func @transform_8(%arg0: i32) -> (i32, i32) {
    %c0_i32 = arith.constant 0 : i32
    %c0_i32_0 = arith.constant 0 : i32
    %c0_i32_1 = arith.constant 0 : i32
    return %c0_i32, %c0_i32_0 : i32, i32
  }
  func.func @transform_9(%arg0: i32) -> (i32, i32) {
    %c0_i32 = arith.constant 0 : i32
    %c0_i32_0 = arith.constant 0 : i32
    %c0_i32_1 = arith.constant 0 : i32
    return %c0_i32, %c0_i32_0 : i32, i32
  }
}

</mosaic_0001>

<llo_original>
// kernel: tpu_custom_call.1
$region0: #{tpu_custom_call.1}
  #allocation0 [shape = 'u32[]', space=smem, size = 0x4, offset = 0x4, fixed_abs, tag = 'smem constant byte address 0x4 - core index']
  #allocation1 [shape = 'u32[144,128]{1,0:T(1,128)}', space=vmem, size = 0x12000, scoped, tag = 'internal scratch']
  #allocation2 [shape = 'f32[8,512]{1,0:T(8,128)}', space=vmem, size = 0x4000, scoped, tag = 'scratch operand']
  #allocation3 [shape = 'f32[1,512]{1,0:T(1,128)}', space=vmem, size = 0x800, scoped, tag = 'scratch operand']
  #allocation4 [shape = 'f32[1,512]{1,0:T(1,128)}', space=vmem, size = 0x800, scoped, tag = 'scratch operand']
  %s0 = inlined_call_operand.hbm [shape: f32[8,1280], index: 0, kind: input, shape index: {}]
  %s1 = inlined_call_operand.hbm [shape: bf16[1280,512], index: 1, kind: input, shape index: {}]
  %s2 = inlined_call_operand.hbm [shape: f32[1,512], index: 2, kind: input, shape index: {}]
  %s3 = inlined_call_operand.hbm [shape: f32[1,512], index: 3, kind: input, shape index: {}]
  %s4 = inlined_call_operand.hbm [shape: bf16[512,128], index: 4, kind: input, shape index: {}]
  %s5 = inlined_call_operand.hbm [shape: f32[1,128], index: 5, kind: input, shape index: {}]
  %s6 = inlined_call_operand.hbm [shape: f32[1,128], index: 6, kind: input, shape index: {}]
  %s7 = inlined_call_operand.hbm [shape: bf16[128,128], index: 7, kind: input, shape index: {}]
  %s8 = inlined_call_operand.hbm [shape: f32[1,128], index: 8, kind: input, shape index: {}]
  %s9 = inlined_call_operand.hbm [shape: f32[8,128], index: 9, kind: output, shape index: {}]
  %s10 = sld [smem:[#allocation0]]
  $region90: #{tpu_custom_call.1} parent=0
    _
  %s12 = ssub.s32 1, %s10
  %s13 = scalar_select 0, %s12, %s10
  $region1: #{tpu_custom_call.1} parent=0
    #allocation5 [shape = 'u8[40960]{0}', space=vmem, size = 0xa000, scoped, tag = 'input window, operand 0, single buffered']
    #allocation6 [shape = 's32[1]{0}', space=sflag, size = 0x4, scoped, tag = 'scoped memory for tpu_custom_call.1']
    #allocation7 [shape = 's32[1]{0}', space=sflag, size = 0x4, scoped, tag = 'scoped memory for tpu_custom_call.1']
    #allocation8 [shape = 'u8[1310720]{0}', space=vmem, size = 0x140000, scoped, tag = 'input window, operand 1, single buffered']
    #allocation9 [shape = 's32[1]{0}', space=sflag, size = 0x4, scoped, tag = 'scoped memory for tpu_custom_call.1']
    #allocation10 [shape = 'u8[2048]{0}', space=vmem, size = 0x800, scoped, tag = 'input window, operand 2, single buffered']
    #allocation11 [shape = 'u8[2048]{0}', space=vmem, size = 0x800, scoped, tag = 'input window, operand 3, single buffered']
    #allocation12 [shape = 's32[1]{0}', space=sflag, size = 0x4, scoped, tag = 'scoped memory for tpu_custom_call.1']
    #allocation13 [shape = 'u8[131072]{0}', space=vmem, size = 0x20000, scoped, tag = 'input window, operand 4, single buffered']
    #allocation14 [shape = 'u8[512]{0}', space=vmem, size = 0x400, scoped, tag = 'input window, operand 5, single buffered']
    #allocation15 [shape = 's32[1]{0}', space=sflag, size = 0x4, scoped, tag = 'scoped memory for tpu_custom_call.1']
    #allocation16 [shape = 'u8[512]{0}', space=vmem, size = 0x400, scoped, tag = 'input window, operand 6, single buffered']
    #allocation17 [shape = 'u8[32768]{0}', space=vmem, size = 0x8000, scoped, tag = 'input window, operand 7, single buffered']
    #allocation18 [shape = 's32[1]{0}', space=sflag, size = 0x4, scoped, tag = 'scoped memory for tpu_custom_call.1']
    #allocation19 [shape = 'u8[512]{0}', space=vmem, size = 0x400, scoped, tag = 'input window, operand 8, single buffered']
    #allocation20 [shape = 'u8[4096]{0}', space=vmem, size = 0x1000, scoped, tag = 'output window, operand 0, single buffered']
    %14 = vsyncpa [#allocation6], 0
    %15 = vsyncpa [#allocation9], 0
    %16 = vsyncpa [#allocation12], 0
    %17 = vsyncpa [#allocation15], 0
    %18 = vsyncpa [#allocation18], 0
    %19 = vsyncpa [#allocation7], 0
    // Predicated region
    $region2: #{tpu_custom_call.1} parent=1 // pred_check
      _
    $region3: #{tpu_custom_call.1} parent=1 // pred_check_branch
      %21 = sbr.rel (0) target = $region5
    $region4: #{tpu_custom_call.1} parent=1 // pred_region
      %s23 = ssub.s32 1280, 1280
      %24 = vsyncadd [#allocation6], %s23
      %s26 = sshll.u32 [#allocation5], 4
      %s27 = int_to_ptr.vmem [resolvable:$true] %s26
      %29 = dma.hbm_to_vmem [thread:$0]  %s0, 1280, %s27, [#allocation6]
    $region5: #{tpu_custom_call.1} parent=1 // pred_fallthru
      _
    // Predicated region
    $region6: #{tpu_custom_call.1} parent=1 // pred_check
      _
    $region7: #{tpu_custom_call.1} parent=1 // pred_check_branch
      %31 = sbr.rel (0) target = $region9
    $region8: #{tpu_custom_call.1} parent=1 // pred_region
      %s33 = ssub.s32 40960, 40960
      %34 = vsyncadd [#allocation9], %s33
      %s35 = sshll.u32 [#allocation8], 4
      %s36 = int_to_ptr.vmem [resolvable:$true] %s35
      %41 = dma.hbm_to_vmem [thread:$0]  %s1, 40960, %s36, [#allocation9], 256, 256, 16
    $region9: #{tpu_custom_call.1} parent=1 // pred_fallthru
      _
    // Predicated region
    $region10: #{tpu_custom_call.1} parent=1 // pred_check
      _
    $region11: #{tpu_custom_call.1} parent=1 // pred_check_branch
      %43 = sbr.rel (0) target = $region13
    $region12: #{tpu_custom_call.1} parent=1 // pred_region
      %s45 = ssub.s32 64, 64
      %46 = vsyncadd [#allocation9], %s45
      %s48 = sshll.u32 [#allocation10], 4
      %s49 = int_to_ptr.vmem [resolvable:$true] %s48
      %51 = dma.hbm_to_vmem [thread:$0]  %s2, 64, %s49, [#allocation9]
    $region13: #{tpu_custom_call.1} parent=1 // pred_fallthru
      _
    // Predicated region
    $region14: #{tpu_custom_call.1} parent=1 // pred_check
      _
    $region15: #{tpu_custom_call.1} parent=1 // pred_check_branch
      %53 = sbr.rel (0) target = $region17
    $region16: #{tpu_custom_call.1} parent=1 // pred_region
      %s55 = ssub.s32 64, 64
      %56 = vsyncadd [#allocation12], %s55
      %s58 = sshll.u32 [#allocation11], 4
      %s59 = int_to_ptr.vmem [resolvable:$true] %s58
      %61 = dma.hbm_to_vmem [thread:$0]  %s3, 64, %s59, [#allocation12]
    $region17: #{tpu_custom_call.1} parent=1 // pred_fallthru
      _
    // Predicated region
    $region18: #{tpu_custom_call.1} parent=1 // pred_check
      _
    $region19: #{tpu_custom_call.1} parent=1 // pred_check_branch
      %63 = sbr.rel (0) target = $region21
    $region20: #{tpu_custom_call.1} parent=1 // pred_region
      %s65 = ssub.s32 4096, 4096
      %66 = vsyncadd [#allocation12], %s65
      %s67 = sshll.u32 [#allocation13], 4
      %s68 = int_to_ptr.vmem [resolvable:$true] %s67
      %73 = dma.hbm_to_vmem [thread:$0]  %s4, 4096, %s68, [#allocation12], 64, 64, 4
    $region21: #{tpu_custom_call.1} parent=1 // pred_fallthru
      _
    // Predicated region
    $region22: #{tpu_custom_call.1} parent=1 // pred_check
      _
    $region23: #{tpu_custom_call.1} parent=1 // pred_check_branch
      %75 = sbr.rel (0) target = $region25
    $region24: #{tpu_custom_call.1} parent=1 // pred_region
      %s77 = ssub.s32 16, 16
      %78 = vsyncadd [#allocation15], %s77
      %s80 = sshll.u32 [#allocation14], 4
      %s81 = int_to_ptr.vmem [resolvable:$true] %s80
      %83 = dma.hbm_to_vmem [thread:$0]  %s5, 16, %s81, [#allocation15]
    $region25: #{tpu_custom_call.1} parent=1 // pred_fallthru
      _
    // Predicated region
    $region26: #{tpu_custom_call.1} parent=1 // pred_check
      _
    $region27: #{tpu_custom_call.1} parent=1 // pred_check_branch
      %85 = sbr.rel (0) target = $region29
    $region28: #{tpu_custom_call.1} parent=1 // pred_region
      %s87 = ssub.s32 16, 16
      %88 = vsyncadd [#allocation15], %s87
      %s90 = sshll.u32 [#allocation16], 4
      %s91 = int_to_ptr.vmem [resolvable:$true] %s90
      %93 = dma.hbm_to_vmem [thread:$0]  %s6, 16, %s91, [#allocation15]
    $region29: #{tpu_custom_call.1} parent=1 // pred_fallthru
      _
    // Predicated region
    $region30: #{tpu_custom_call.1} parent=1 // pred_check
      _
    $region31: #{tpu_custom_call.1} parent=1 // pred_check_branch
      %95 = sbr.rel (0) target = $region33
    $region32: #{tpu_custom_call.1} parent=1 // pred_region
      %s97 = ssub.s32 1024, 1024
      %98 = vsyncadd [#allocation18], %s97
      %s99 = sshll.u32 [#allocation17], 4
      %s100 = int_to_ptr.vmem [resolvable:$true] %s99
      %105 = dma.hbm_to_vmem [thread:$0]  %s7, 1024, %s100, [#allocation18], 64, 64, 4
    $region33: #{tpu_custom_call.1} parent=1 // pred_fallthru
      _
    // Predicated region
    $region34: #{tpu_custom_call.1} parent=1 // pred_check
      _
    $region35: #{tpu_custom_call.1} parent=1 // pred_check_branch
      %107 = sbr.rel (0) target = $region37
    $region36: #{tpu_custom_call.1} parent=1 // pred_region
      %s109 = ssub.s32 16, 16
      %110 = vsyncadd [#allocation18], %s109
      %s112 = sshll.u32 [#allocation19], 4
      %s113 = int_to_ptr.vmem [resolvable:$true] %s112
      %115 = dma.hbm_to_vmem [thread:$0]  %s8, 16, %s113, [#allocation18]
    $region37: #{tpu_custom_call.1} parent=1 // pred_fallthru
      _
    // Predicated region
    $region38: #{tpu_custom_call.1} parent=1 // pred_check
      _
    $region39: #{tpu_custom_call.1} parent=1 // pred_check_branch
      %117 = sbr.rel (0) target = $region41
    $region40: #{tpu_custom_call.1} parent=1 // pred_region
      %118 = dma.done [#allocation6], 1280
    $region41: #{tpu_custom_call.1} parent=1 // pred_fallthru
      _
    // Predicated region
    $region42: #{tpu_custom_call.1} parent=1 // pred_check
      _
    $region43: #{tpu_custom_call.1} parent=1 // pred_check_branch
      %120 = sbr.rel (0) target = $region45
    $region44: #{tpu_custom_call.1} parent=1 // pred_region
      %121 = dma.done [#allocation9], 40960
    $region45: #{tpu_custom_call.1} parent=1 // pred_fallthru
      _
    // Predicated region
    $region46: #{tpu_custom_call.1} parent=1 // pred_check
      _
    $region47: #{tpu_custom_call.1} parent=1 // pred_check_branch
      %123 = sbr.rel (0) target = $region49
    $region48: #{tpu_custom_call.1} parent=1 // pred_region
      %124 = dma.done [#allocation9], 64
    $region49: #{tpu_custom_call.1} parent=1 // pred_fallthru
      _
    // Predicated region
    $region50: #{tpu_custom_call.1} parent=1 // pred_check
      _
    $region51: #{tpu_custom_call.1} parent=1 // pred_check_branch
      %126 = sbr.rel (0) target = $region53
    $region52: #{tpu_custom_call.1} parent=1 // pred_region
      %127 = dma.done [#allocation12], 64
    $region53: #{tpu_custom_call.1} parent=1 // pred_fallthru
      _
    // Predicated region
    $region54: #{tpu_custom_call.1} parent=1 // pred_check
      _
    $region55: #{tpu_custom_call.1} parent=1 // pred_check_branch
      %129 = sbr.rel (0) target = $region57
    $region56: #{tpu_custom_call.1} parent=1 // pred_region
      %130 = dma.done [#allocation12], 4096
    $region57: #{tpu_custom_call.1} parent=1 // pred_fallthru
      _
    // Predicated region
    $region58: #{tpu_custom_call.1} parent=1 // pred_check
      _
    $region59: #{tpu_custom_call.1} parent=1 // pred_check_branch
      %132 = sbr.rel (0) target = $region61
    $region60: #{tpu_custom_call.1} parent=1 // pred_region
      %133 = dma.done [#allocation15], 16
    $region61: #{tpu_custom_call.1} parent=1 // pred_fallthru
      _
    // Predicated region
    $region62: #{tpu_custom_call.1} parent=1 // pred_check
      _
    $region63: #{tpu_custom_call.1} parent=1 // pred_check_branch
      %135 = sbr.rel (0) target = $region65
    $region64: #{tpu_custom_call.1} parent=1 // pred_region
      %136 = dma.done [#allocation15], 16
    $region65: #{tpu_custom_call.1} parent=1 // pred_fallthru
      _
    // Predicated region
    $region66: #{tpu_custom_call.1} parent=1 // pred_check
      _
    $region67: #{tpu_custom_call.1} parent=1 // pred_check_branch
      %138 = sbr.rel (0) target = $region69
    $region68: #{tpu_custom_call.1} parent=1 // pred_region
      %139 = dma.done [#allocation18], 1024
    $region69: #{tpu_custom_call.1} parent=1 // pred_fallthru
      _
    // Predicated region
    $region70: #{tpu_custom_call.1} parent=1 // pred_check
      _
    $region71: #{tpu_custom_call.1} parent=1 // pred_check_branch
      %141 = sbr.rel (0) target = $region73
    $region72: #{tpu_custom_call.1} parent=1 // pred_region
      %142 = dma.done [#allocation18], 16
    $region73: #{tpu_custom_call.1} parent=1 // pred_fallthru
      _
    %p144 = scmp.eq.s32.totalorder 0, 0
    // Predicated region
    $region74: #{tpu_custom_call.1} parent=1 // pred_check
      %p145 = pneg %p144
    $region75: #{tpu_custom_call.1} parent=1 // pred_check_branch
      %147 = sbr.rel (%p145) target = $region77
    $region76: #{tpu_custom_call.1} parent=1 // pred_region
      %v148 = vlaneseq
      %vm149 = vcmp.ge.s32.totalorder %v148, 0
      %vm150 = vcmp.lt.s32.totalorder %v148, 512
      %vm151 = vmand %vm149, %vm150
      %152 = vst.msk [vmem:[#allocation3] sm:$0xf] %vm151, 0.0
      %153 = vst.msk [vmem:[#allocation4] sm:$0xf] %vm151, 0.0
    $region77: #{tpu_custom_call.1} parent=1 // pred_fallthru
      _
    %v154 = vld [vmem:[#allocation5] sm:$0xff]
    %v155 = vld [vmem:[#allocation5 + $0x8] sm:$0xff]
    %v156 = vld [vmem:[#allocation5 + $0x10] sm:$0xff]
    %v157 = vld [vmem:[#allocation5 + $0x18] sm:$0xff]
    %v158 = vld [vmem:[#allocation5 + $0x20] sm:$0xff]
    %v159 = vld [vmem:[#allocation5 + $0x28] sm:$0xff]
    %v160 = vld [vmem:[#allocation5 + $0x30] sm:$0xff]
    %v161 = vld [vmem:[#allocation5 + $0x38] sm:$0xff]
    %v162 = vld [vmem:[#allocation5 + $0x40] sm:$0xff]
    %v163 = vld [vmem:[#allocation5 + $0x48] sm:$0xff]
    %v164 = vpack.c.bf16 %v154, %v154
    %v165 = vpack.c.bf16 %v155, %v155
    %v166 = vpack.c.bf16 %v156, %v156
    %v167 = vpack.c.bf16 %v157, %v157
    %v168 = vpack.c.bf16 %v158, %v158
    %v169 = vpack.c.bf16 %v159, %v159
    %v170 = vpack.c.bf16 %v160, %v160
    %v171 = vpack.c.bf16 %v161, %v161
    %v172 = vpack.c.bf16 %v162, %v162
    %v173 = vpack.c.bf16 %v163, %v163
    %v174 = vld [vmem:[#allocation8] sm:$0xff]
    %v175 = vld [vmem:[#allocation8 + $0x8] sm:$0xff]
    %v176 = vld [vmem:[#allocation8 + $0x10] sm:$0xff]
    %v177 = vld [vmem:[#allocation8 + $0x18] sm:$0xff]
    %v178 = vld [vmem:[#allocation8 + $0x20] sm:$0xff]
    %v179 = vld [vmem:[#allocation8 + $0x28] sm:$0xff]
    %v180 = vld [vmem:[#allocation8 + $0x30] sm:$0xff]
    %v181 = vld [vmem:[#allocation8 + $0x38] sm:$0xff]
    %v182 = vld [vmem:[#allocation8 + $0x40] sm:$0xff]
    %v183 = vld [vmem:[#allocation8 + $0x48] sm:$0xff]
    %v184 = vld [vmem:[#allocation8 + $0x50] sm:$0xff]
    %v185 = vld [vmem:[#allocation8 + $0x58] sm:$0xff]
    %v186 = vld [vmem:[#allocation8 + $0x60] sm:$0xff]
    %v187 = vld [vmem:[#allocation8 + $0x68] sm:$0xff]
    %v188 = vld [vmem:[#allocation8 + $0x70] sm:$0xff]
    %v189 = vld [vmem:[#allocation8 + $0x78] sm:$0xff]
    %v190 = vld [vmem:[#allocation8 + $0x80] sm:$0xff]
    %v191 = vld [vmem:[#allocation8 + $0x88] sm:$0xff]
    %v192 = vld [vmem:[#allocation8 + $0x90] sm:$0xff]
    %v193 = vld [vmem:[#allocation8 + $0x98] sm:$0xff]
    %v194 = vld [vmem:[#allocation8 + $0xa0] sm:$0xff]
    %v195 = vld [vmem:[#allocation8 + $0xa8] sm:$0xff]
    %v196 = vld [vmem:[#allocation8 + $0xb0] sm:$0xff]
    %v197 = vld [vmem:[#allocation8 + $0xb8] sm:$0xff]
    %v198 = vld [vmem:[#allocation8 + $0xc0] sm:$0xff]
    %v199 = vld [vmem:[#allocation8 + $0xc8] sm:$0xff]
    %v200 = vld [vmem:[#allocation8 + $0xd0] sm:$0xff]
    %v201 = vld [vmem:[#allocation8 + $0xd8] sm:$0xff]
    %v202 = vld [vmem:[#allocation8 + $0xe0] sm:$0xff]
    %v203 = vld [vmem:[#allocation8 + $0xe8] sm:$0xff]
    %v204 = vld [vmem:[#allocation8 + $0xf0] sm:$0xff]
    %v205 = vld [vmem:[#allocation8 + $0xf8] sm:$0xff]
    %v206 = vld [vmem:[#allocation8 + $0x100] sm:$0xff]
    %v207 = vld [vmem:[#allocation8 + $0x108] sm:$0xff]
    %v208 = vld [vmem:[#allocation8 + $0x110] sm:$0xff]
    %v209 = vld [vmem:[#allocation8 + $0x118] sm:$0xff]
    %v210 = vld [vmem:[#allocation8 + $0x120] sm:$0xff]
    %v211 = vld [vmem:[#allocation8 + $0x128] sm:$0xff]
    %v212 = vld [vmem:[#allocation8 + $0x130] sm:$0xff]
    %v213 = vld [vmem:[#allocation8 + $0x138] sm:$0xff]
    %v214 = vld [vmem:[#allocation8 + $0x140] sm:$0xff]
    %v215 = vld [vmem:[#allocation8 + $0x148] sm:$0xff]
    %v216 = vld [vmem:[#allocation8 + $0x150] sm:$0xff]
    %v217 = vld [vmem:[#allocation8 + $0x158] sm:$0xff]
    %v218 = vld [vmem:[#allocation8 + $0x160] sm:$0xff]
    %v219 = vld [vmem:[#allocation8 + $0x168] sm:$0xff]
    %v220 = vld [vmem:[#allocation8 + $0x170] sm:$0xff]
    %v221 = vld [vmem:[#allocation8 + $0x178] sm:$0xff]
    %v222 = vld [vmem:[#allocation8 + $0x180] sm:$0xff]
    %v223 = vld [vmem:[#allocation8 + $0x188] sm:$0xff]
    %v224 = vld [vmem:[#allocation8 + $0x190] sm:$0xff]
    %v225 = vld [vmem:[#allocation8 + $0x198] sm:$0xff]
    %v226 = vld [vmem:[#allocation8 + $0x1a0] sm:$0xff]
    %v227 = vld [vmem:[#allocation8 + $0x1a8] sm:$0xff]
    %v228 = vld [vmem:[#allocation8 + $0x1b0] sm:$0xff]
    %v229 = vld [vmem:[#allocation8 + $0x1b8] sm:$0xff]
    %v230 = vld [vmem:[#allocation8 + $0x1c0] sm:$0xff]
    %v231 = vld [vmem:[#allocation8 + $0x1c8] sm:$0xff]
    %v232 = vld [vmem:[#allocation8 + $0x1d0] sm:$0xff]
    %v233 = vld [vmem:[#allocation8 + $0x1d8] sm:$0xff]
    %v234 = vld [vmem:[#allocation8 + $0x1e0] sm:$0xff]
    %v235 = vld [vmem:[#allocation8 + $0x1e8] sm:$0xff]
    %v236 = vld [vmem:[#allocation8 + $0x1f0] sm:$0xff]
    %v237 = vld [vmem:[#allocation8 + $0x1f8] sm:$0xff]
    %v238 = vld [vmem:[#allocation8 + $0x200] sm:$0xff]
    %v239 = vld [vmem:[#allocation8 + $0x208] sm:$0xff]
    %v240 = vld [vmem:[#allocation8 + $0x210] sm:$0xff]
    %v241 = vld [vmem:[#allocation8 + $0x218] sm:$0xff]
    %v242 = vld [vmem:[#allocation8 + $0x220] sm:$0xff]
    %v243 = vld [vmem:[#allocation8 + $0x228] sm:$0xff]
    %v244 = vld [vmem:[#allocation8 + $0x230] sm:$0xff]
    %v245 = vld [vmem:[#allocation8 + $0x238] sm:$0xff]
    %v246 = vld [vmem:[#allocation8 + $0x240] sm:$0xff]
    %v247 = vld [vmem:[#allocation8 + $0x248] sm:$0xff]
    %v248 = vld [vmem:[#allocation8 + $0x250] sm:$0xff]
    %v249 = vld [vmem:[#allocation8 + $0x258] sm:$0xff]
    %v250 = vld [vmem:[#allocation8 + $0x260] sm:$0xff]
    %v251 = vld [vmem:[#allocation8 + $0x268] sm:$0xff]
    %v252 = vld [vmem:[#allocation8 + $0x270] sm:$0xff]
    %v253 = vld [vmem:[#allocation8 + $0x278] sm:$0xff]
    %v254 = vld [vmem:[#allocation8 + $0x280] sm:$0xff]
    %v255 = vld [vmem:[#allocation8 + $0x288] sm:$0xff]
    %v256 = vld [vmem:[#allocation8 + $0x290] sm:$0xff]
    %v257 = vld [vmem:[#allocation8 + $0x298] sm:$0xff]
    %v258 = vld [vmem:[#allocation8 + $0x2a0] sm:$0xff]
    %v259 = vld [vmem:[#allocation8 + $0x2a8] sm:$0xff]
    %v260 = vld [vmem:[#allocation8 + $0x2b0] sm:$0xff]
    %v261 = vld [vmem:[#allocation8 + $0x2b8] sm:$0xff]
    %v262 = vld [vmem:[#allocation8 + $0x2c0] sm:$0xff]
    %v263 = vld [vmem:[#allocation8 + $0x2c8] sm:$0xff]
    %v264 = vld [vmem:[#allocation8 + $0x2d0] sm:$0xff]
    %v265 = vld [vmem:[#allocation8 + $0x2d8] sm:$0xff]
    %v266 = vld [vmem:[#allocation8 + $0x2e0] sm:$0xff]
    %v267 = vld [vmem:[#allocation8 + $0x2e8] sm:$0xff]
    %v268 = vld [vmem:[#allocation8 + $0x2f0] sm:$0xff]
    %v269 = vld [vmem:[#allocation8 + $0x2f8] sm:$0xff]
    %v270 = vld [vmem:[#allocation8 + $0x300] sm:$0xff]
    %v271 = vld [vmem:[#allocation8 + $0x308] sm:$0xff]
    %v272 = vld [vmem:[#allocation8 + $0x310] sm:$0xff]
    %v273 = vld [vmem:[#allocation8 + $0x318] sm:$0xff]
    %v274 = vld [vmem:[#allocation8 + $0x320] sm:$0xff]
    %v275 = vld [vmem:[#allocation8 + $0x328] sm:$0xff]
    %v276 = vld [vmem:[#allocation8 + $0x330] sm:$0xff]
    %v277 = vld [vmem:[#allocation8 + $0x338] sm:$0xff]
    %v278 = vld [vmem:[#allocation8 + $0x340] sm:$0xff]
    %v279 = vld [vmem:[#allocation8 + $0x348] sm:$0xff]
    %v280 = vld [vmem:[#allocation8 + $0x350] sm:$0xff]
    %v281 = vld [vmem:[#allocation8 + $0x358] sm:$0xff]
    %v282 = vld [vmem:[#allocation8 + $0x360] sm:$0xff]
    %v283 = vld [vmem:[#allocation8 + $0x368] sm:$0xff]
    %v284 = vld [vmem:[#allocation8 + $0x370] sm:$0xff]
    %v285 = vld [vmem:[#allocation8 + $0x378] sm:$0xff]
    %v286 = vld [vmem:[#allocation8 + $0x380] sm:$0xff]
    %v287 = vld [vmem:[#allocation8 + $0x388] sm:$0xff]
    %v288 = vld [vmem:[#allocation8 + $0x390] sm:$0xff]
    %v289 = vld [vmem:[#allocation8 + $0x398] sm:$0xff]
    %v290 = vld [vmem:[#allocation8 + $0x3a0] sm:$0xff]
    %v291 = vld [vmem:[#allocation8 + $0x3a8] sm:$0xff]
    %v292 = vld [vmem:[#allocation8 + $0x3b0] sm:$0xff]
    %v293 = vld [vmem:[#allocation8 + $0x3b8] sm:$0xff]
    %v294 = vld [vmem:[#allocation8 + $0x3c0] sm:$0xff]
    %v295 = vld [vmem:[#allocation8 + $0x3c8] sm:$0xff]
    %v296 = vld [vmem:[#allocation8 + $0x3d0] sm:$0xff]
    %v297 = vld [vmem:[#allocation8 + $0x3d8] sm:$0xff]
    %v298 = vld [vmem:[#allocation8 + $0x3e0] sm:$0xff]
    %v299 = vld [vmem:[#allocation8 + $0x3e8] sm:$0xff]
    %v300 = vld [vmem:[#allocation8 + $0x3f0] sm:$0xff]
    %v301 = vld [vmem:[#allocation8 + $0x3f8] sm:$0xff]
    %v302 = vld [vmem:[#allocation8 + $0x400] sm:$0xff]
    %v303 = vld [vmem:[#allocation8 + $0x408] sm:$0xff]
    %v304 = vld [vmem:[#allocation8 + $0x410] sm:$0xff]
    %v305 = vld [vmem:[#allocation8 + $0x418] sm:$0xff]
    %v306 = vld [vmem:[#allocation8 + $0x420] sm:$0xff]
    %v307 = vld [vmem:[#allocation8 + $0x428] sm:$0xff]
    %v308 = vld [vmem:[#allocation8 + $0x430] sm:$0xff]
    %v309 = vld [vmem:[#allocation8 + $0x438] sm:$0xff]
    %v310 = vld [vmem:[#allocation8 + $0x440] sm:$0xff]
    %v311 = vld [vmem:[#allocation8 + $0x448] sm:$0xff]
    %v312 = vld [vmem:[#allocation8 + $0x450] sm:$0xff]
    %v313 = vld [vmem:[#allocation8 + $0x458] sm:$0xff]
    %v314 = vld [vmem:[#allocation8 + $0x460] sm:$0xff]
    %v315 = vld [vmem:[#allocation8 + $0x468] sm:$0xff]
    %v316 = vld [vmem:[#allocation8 + $0x470] sm:$0xff]
    %v317 = vld [vmem:[#allocation8 + $0x478] sm:$0xff]
    %v318 = vld [vmem:[#allocation8 + $0x480] sm:$0xff]
    %v319 = vld [vmem:[#allocation8 + $0x488] sm:$0xff]
    %v320 = vld [vmem:[#allocation8 + $0x490] sm:$0xff]
    %v321 = vld [vmem:[#allocation8 + $0x498] sm:$0xff]
    %v322 = vld [vmem:[#allocation8 + $0x4a0] sm:$0xff]
    %v323 = vld [vmem:[#allocation8 + $0x4a8] sm:$0xff]
    %v324 = vld [vmem:[#allocation8 + $0x4b0] sm:$0xff]
    %v325 = vld [vmem:[#allocation8 + $0x4b8] sm:$0xff]
    %v326 = vld [vmem:[#allocation8 + $0x4c0] sm:$0xff]
    %v327 = vld [vmem:[#allocation8 + $0x4c8] sm:$0xff]
    %v328 = vld [vmem:[#allocation8 + $0x4d0] sm:$0xff]
    %v329 = vld [vmem:[#allocation8 + $0x4d8] sm:$0xff]
    %v330 = vld [vmem:[#allocation8 + $0x4e0] sm:$0xff]
    %v331 = vld [vmem:[#allocation8 + $0x4e8] sm:$0xff]
    %v332 = vld [vmem:[#allocation8 + $0x4f0] sm:$0xff]
    %v333 = vld [vmem:[#allocation8 + $0x4f8] sm:$0xff]
    %v334 = vld [vmem:[#allocation8 + $0x500] sm:$0xff]
    %v335 = vld [vmem:[#allocation8 + $0x508] sm:$0xff]
    %v336 = vld [vmem:[#allocation8 + $0x510] sm:$0xff]
    %v337 = vld [vmem:[#allocation8 + $0x518] sm:$0xff]
    %v338 = vld [vmem:[#allocation8 + $0x520] sm:$0xff]
    %v339 = vld [vmem:[#allocation8 + $0x528] sm:$0xff]
    %v340 = vld [vmem:[#allocation8 + $0x530] sm:$0xff]
    %v341 = vld [vmem:[#allocation8 + $0x538] sm:$0xff]
    %v342 = vld [vmem:[#allocation8 + $0x540] sm:$0xff]
    %v343 = vld [vmem:[#allocation8 + $0x548] sm:$0xff]
    %v344 = vld [vmem:[#allocation8 + $0x550] sm:$0xff]
    %v345 = vld [vmem:[#allocation8 + $0x558] sm:$0xff]
    %v346 = vld [vmem:[#allocation8 + $0x560] sm:$0xff]
    %v347 = vld [vmem:[#allocation8 + $0x568] sm:$0xff]
    %v348 = vld [vmem:[#allocation8 + $0x570] sm:$0xff]
    %v349 = vld [vmem:[#allocation8 + $0x578] sm:$0xff]
    %v350 = vld [vmem:[#allocation8 + $0x580] sm:$0xff]
    %v351 = vld [vmem:[#allocation8 + $0x588] sm:$0xff]
    %v352 = vld [vmem:[#allocation8 + $0x590] sm:$0xff]
    %v353 = vld [vmem:[#allocation8 + $0x598] sm:$0xff]
    %v354 = vld [vmem:[#allocation8 + $0x5a0] sm:$0xff]
    %v355 = vld [vmem:[#allocation8 + $0x5a8] sm:$0xff]
    %v356 = vld [vmem:[#allocation8 + $0x5b0] sm:$0xff]
    %v357 = vld [vmem:[#allocation8 + $0x5b8] sm:$0xff]
    %v358 = vld [vmem:[#allocation8 + $0x5c0] sm:$0xff]
    %v359 = vld [vmem:[#allocation8 + $0x5c8] sm:$0xff]
    %v360 = vld [vmem:[#allocation8 + $0x5d0] sm:$0xff]
    %v361 = vld [vmem:[#allocation8 + $0x5d8] sm:$0xff]
    %v362 = vld [vmem:[#allocation8 + $0x5e0] sm:$0xff]
    %v363 = vld [vmem:[#allocation8 + $0x5e8] sm:$0xff]
    %v364 = vld [vmem:[#allocation8 + $0x5f0] sm:$0xff]
    %v365 = vld [vmem:[#allocation8 + $0x5f8] sm:$0xff]
    %v366 = vld [vmem:[#allocation8 + $0x600] sm:$0xff]
    %v367 = vld [vmem:[#allocation8 + $0x608] sm:$0xff]
    %v368 = vld [vmem:[#allocation8 + $0x610] sm:$0xff]
    %v369 = vld [vmem:[#allocation8 + $0x618] sm:$0xff]
    %v370 = vld [vmem:[#allocation8 + $0x620] sm:$0xff]
    %v371 = vld [vmem:[#allocation8 + $0x628] sm:$0xff]
    %v372 = vld [vmem:[#allocation8 + $0x630] sm:$0xff]
    %v373 = vld [vmem:[#allocation8 + $0x638] sm:$0xff]
    %v374 = vld [vmem:[#allocation8 + $0x640] sm:$0xff]
    %v375 = vld [vmem:[#allocation8 + $0x648] sm:$0xff]
    %v376 = vld [vmem:[#allocation8 + $0x650] sm:$0xff]
    %v377 = vld [vmem:[#allocation8 + $0x658] sm:$0xff]
    %v378 = vld [vmem:[#allocation8 + $0x660] sm:$0xff]
    %v379 = vld [vmem:[#allocation8 + $0x668] sm:$0xff]
    %v380 = vld [vmem:[#allocation8 + $0x670] sm:$0xff]
    %v381 = vld [vmem:[#allocation8 + $0x678] sm:$0xff]
    %v382 = vld [vmem:[#allocation8 + $0x680] sm:$0xff]
    %v383 = vld [vmem:[#allocation8 + $0x688] sm:$0xff]
    %v384 = vld [vmem:[#allocation8 + $0x690] sm:$0xff]
    %v385 = vld [vmem:[#allocation8 + $0x698] sm:$0xff]
    %v386 = vld [vmem:[#allocation8 + $0x6a0] sm:$0xff]
    %v387 = vld [vmem:[#allocation8 + $0x6a8] sm:$0xff]
    %v388 = vld [vmem:[#allocation8 + $0x6b0] sm:$0xff]
    %v389 = vld [vmem:[#allocation8 + $0x6b8] sm:$0xff]
    %v390 = vld [vmem:[#allocation8 + $0x6c0] sm:$0xff]
    %v391 = vld [vmem:[#allocation8 + $0x6c8] sm:$0xff]
    %v392 = vld [vmem:[#allocation8 + $0x6d0] sm:$0xff]
    %v393 = vld [vmem:[#allocation8 + $0x6d8] sm:$0xff]
    %v394 = vld [vmem:[#allocation8 + $0x6e0] sm:$0xff]
    %v395 = vld [vmem:[#allocation8 + $0x6e8] sm:$0xff]
    %v396 = vld [vmem:[#allocation8 + $0x6f0] sm:$0xff]
    %v397 = vld [vmem:[#allocation8 + $0x6f8] sm:$0xff]
    %v398 = vld [vmem:[#allocation8 + $0x700] sm:$0xff]
    %v399 = vld [vmem:[#allocation8 + $0x708] sm:$0xff]
    %v400 = vld [vmem:[#allocation8 + $0x710] sm:$0xff]
    %v401 = vld [vmem:[#allocation8 + $0x718] sm:$0xff]
    %v402 = vld [vmem:[#allocation8 + $0x720] sm:$0xff]
    %v403 = vld [vmem:[#allocation8 + $0x728] sm:$0xff]
    %v404 = vld [vmem:[#allocation8 + $0x730] sm:$0xff]
    %v405 = vld [vmem:[#allocation8 + $0x738] sm:$0xff]
    %v406 = vld [vmem:[#allocation8 + $0x740] sm:$0xff]
    %v407 = vld [vmem:[#allocation8 + $0x748] sm:$0xff]
    %v408 = vld [vmem:[#allocation8 + $0x750] sm:$0xff]
    %v409 = vld [vmem:[#allocation8 + $0x758] sm:$0xff]
    %v410 = vld [vmem:[#allocation8 + $0x760] sm:$0xff]
    %v411 = vld [vmem:[#allocation8 + $0x768] sm:$0xff]
    %v412 = vld [vmem:[#allocation8 + $0x770] sm:$0xff]
    %v413 = vld [vmem:[#allocation8 + $0x778] sm:$0xff]
    %v414 = vld [vmem:[#allocation8 + $0x780] sm:$0xff]
    %v415 = vld [vmem:[#allocation8 + $0x788] sm:$0xff]
    %v416 = vld [vmem:[#allocation8 + $0x790] sm:$0xff]
    %v417 = vld [vmem:[#allocation8 + $0x798] sm:$0xff]
    %v418 = vld [vmem:[#allocation8 + $0x7a0] sm:$0xff]
    %v419 = vld [vmem:[#allocation8 + $0x7a8] sm:$0xff]
    %v420 = vld [vmem:[#allocation8 + $0x7b0] sm:$0xff]
    %v421 = vld [vmem:[#allocation8 + $0x7b8] sm:$0xff]
    %v422 = vld [vmem:[#allocation8 + $0x7c0] sm:$0xff]
    %v423 = vld [vmem:[#allocation8 + $0x7c8] sm:$0xff]
    %v424 = vld [vmem:[#allocation8 + $0x7d0] sm:$0xff]
    %v425 = vld [vmem:[#allocation8 + $0x7d8] sm:$0xff]
    %v426 = vld [vmem:[#allocation8 + $0x7e0] sm:$0xff]
    %v427 = vld [vmem:[#allocation8 + $0x7e8] sm:$0xff]
    %v428 = vld [vmem:[#allocation8 + $0x7f0] sm:$0xff]
    %v429 = vld [vmem:[#allocation8 + $0x7f8] sm:$0xff]
    %v430 = vld [vmem:[#allocation8 + $0x800] sm:$0xff]
    %v431 = vld [vmem:[#allocation8 + $0x808] sm:$0xff]
    %v432 = vld [vmem:[#allocation8 + $0x810] sm:$0xff]
    %v433 = vld [vmem:[#allocation8 + $0x818] sm:$0xff]
    %v434 = vld [vmem:[#allocation8 + $0x820] sm:$0xff]
    %v435 = vld [vmem:[#allocation8 + $0x828] sm:$0xff]
    %v436 = vld [vmem:[#allocation8 + $0x830] sm:$0xff]
    %v437 = vld [vmem:[#allocation8 + $0x838] sm:$0xff]
    %v438 = vld [vmem:[#allocation8 + $0x840] sm:$0xff]
    %v439 = vld [vmem:[#allocation8 + $0x848] sm:$0xff]
    %v440 = vld [vmem:[#allocation8 + $0x850] sm:$0xff]
    %v441 = vld [vmem:[#allocation8 + $0x858] sm:$0xff]
    %v442 = vld [vmem:[#allocation8 + $0x860] sm:$0xff]
    %v443 = vld [vmem:[#allocation8 + $0x868] sm:$0xff]
    %v444 = vld [vmem:[#allocation8 + $0x870] sm:$0xff]
    %v445 = vld [vmem:[#allocation8 + $0x878] sm:$0xff]
    %v446 = vld [vmem:[#allocation8 + $0x880] sm:$0xff]
    %v447 = vld [vmem:[#allocation8 + $0x888] sm:$0xff]
    %v448 = vld [vmem:[#allocation8 + $0x890] sm:$0xff]
    %v449 = vld [vmem:[#allocation8 + $0x898] sm:$0xff]
    %v450 = vld [vmem:[#allocation8 + $0x8a0] sm:$0xff]
    %v451 = vld [vmem:[#allocation8 + $0x8a8] sm:$0xff]
    %v452 = vld [vmem:[#allocation8 + $0x8b0] sm:$0xff]
    %v453 = vld [vmem:[#allocation8 + $0x8b8] sm:$0xff]
    %v454 = vld [vmem:[#allocation8 + $0x8c0] sm:$0xff]
    %v455 = vld [vmem:[#allocation8 + $0x8c8] sm:$0xff]
    %v456 = vld [vmem:[#allocation8 + $0x8d0] sm:$0xff]
    %v457 = vld [vmem:[#allocation8 + $0x8d8] sm:$0xff]
    %v458 = vld [vmem:[#allocation8 + $0x8e0] sm:$0xff]
    %v459 = vld [vmem:[#allocation8 + $0x8e8] sm:$0xff]
    %v460 = vld [vmem:[#allocation8 + $0x8f0] sm:$0xff]
    %v461 = vld [vmem:[#allocation8 + $0x8f8] sm:$0xff]
    %v462 = vld [vmem:[#allocation8 + $0x900] sm:$0xff]
    %v463 = vld [vmem:[#allocation8 + $0x908] sm:$0xff]
    %v464 = vld [vmem:[#allocation8 + $0x910] sm:$0xff]
    %v465 = vld [vmem:[#allocation8 + $0x918] sm:$0xff]
    %v466 = vld [vmem:[#allocation8 + $0x920] sm:$0xff]
    %v467 = vld [vmem:[#allocation8 + $0x928] sm:$0xff]
    %v468 = vld [vmem:[#allocation8 + $0x930] sm:$0xff]
    %v469 = vld [vmem:[#allocation8 + $0x938] sm:$0xff]
    %v470 = vld [vmem:[#allocation8 + $0x940] sm:$0xff]
    %v471 = vld [vmem:[#allocation8 + $0x948] sm:$0xff]
    %v472 = vld [vmem:[#allocation8 + $0x950] sm:$0xff]
    %v473 = vld [vmem:[#allocation8 + $0x958] sm:$0xff]
    %v474 = vld [vmem:[#allocation8 + $0x960] sm:$0xff]
    %v475 = vld [vmem:[#allocation8 + $0x968] sm:$0xff]
    %v476 = vld [vmem:[#allocation8 + $0x970] sm:$0xff]
    %v477 = vld [vmem:[#allocation8 + $0x978] sm:$0xff]
    %v478 = vld [vmem:[#allocation8 + $0x980] sm:$0xff]
    %v479 = vld [vmem:[#allocation8 + $0x988] sm:$0xff]
    %v480 = vld [vmem:[#allocation8 + $0x990] sm:$0xff]
    %v481 = vld [vmem:[#allocation8 + $0x998] sm:$0xff]
    %v482 = vld [vmem:[#allocation8 + $0x9a0] sm:$0xff]
    %v483 = vld [vmem:[#allocation8 + $0x9a8] sm:$0xff]
    %v484 = vld [vmem:[#allocation8 + $0x9b0] sm:$0xff]
    %v485 = vld [vmem:[#allocation8 + $0x9b8] sm:$0xff]
    %v486 = vld [vmem:[#allocation8 + $0x9c0] sm:$0xff]
    %v487 = vld [vmem:[#allocation8 + $0x9c8] sm:$0xff]
    %v488 = vld [vmem:[#allocation8 + $0x9d0] sm:$0xff]
    %v489 = vld [vmem:[#allocation8 + $0x9d8] sm:$0xff]
    %v490 = vld [vmem:[#allocation8 + $0x9e0] sm:$0xff]
    %v491 = vld [vmem:[#allocation8 + $0x9e8] sm:$0xff]
    %v492 = vld [vmem:[#allocation8 + $0x9f0] sm:$0xff]
    %v493 = vld [vmem:[#allocation8 + $0x9f8] sm:$0xff]
    %v814 = vunpack.c.l.b16 %v174
    %v815 = vunpack.c.h.b16 %v174
    %v816 = vunpack.c.l.b16 %v175
    %v817 = vunpack.c.h.b16 %v175
    %v818 = vunpack.c.l.b16 %v176
    %v819 = vunpack.c.h.b16 %v176
    %v820 = vunpack.c.l.b16 %v177
    %v821 = vunpack.c.h.b16 %v177
    %v822 = vunpack.c.l.b16 %v178
    %v823 = vunpack.c.h.b16 %v178
    %v824 = vunpack.c.l.b16 %v179
    %v825 = vunpack.c.h.b16 %v179
    %v826 = vunpack.c.l.b16 %v180
    %v827 = vunpack.c.h.b16 %v180
    %v828 = vunpack.c.l.b16 %v181
    %v829 = vunpack.c.h.b16 %v181
    %v830 = vunpack.c.l.b16 %v182
    %v831 = vunpack.c.h.b16 %v182
    %v832 = vunpack.c.l.b16 %v183
    %v833 = vunpack.c.h.b16 %v183
    %v834 = vunpack.c.l.b16 %v184
    %v835 = vunpack.c.h.b16 %v184
    %v836 = vunpack.c.l.b16 %v185
    %v837 = vunpack.c.h.b16 %v185
    %v838 = vunpack.c.l.b16 %v186
    %v839 = vunpack.c.h.b16 %v186
    %v840 = vunpack.c.l.b16 %v187
    %v841 = vunpack.c.h.b16 %v187
    %v842 = vunpack.c.l.b16 %v188
    %v843 = vunpack.c.h.b16 %v188
    %v844 = vunpack.c.l.b16 %v189
    %v845 = vunpack.c.h.b16 %v189
    %v846 = vunpack.c.l.b16 %v190
    %v847 = vunpack.c.h.b16 %v190
    %v848 = vunpack.c.l.b16 %v191
    %v849 = vunpack.c.h.b16 %v191
    %v850 = vunpack.c.l.b16 %v192
    %v851 = vunpack.c.h.b16 %v192
    %v852 = vunpack.c.l.b16 %v193
    %v853 = vunpack.c.h.b16 %v193
    %v854 = vunpack.c.l.b16 %v194
    %v855 = vunpack.c.h.b16 %v194
    %v856 = vunpack.c.l.b16 %v195
    %v857 = vunpack.c.h.b16 %v195
    %v858 = vunpack.c.l.b16 %v196
    %v859 = vunpack.c.h.b16 %v196
    %v860 = vunpack.c.l.b16 %v197
    %v861 = vunpack.c.h.b16 %v197
    %v862 = vunpack.c.l.b16 %v198
    %v863 = vunpack.c.h.b16 %v198
    %v864 = vunpack.c.l.b16 %v199
    %v865 = vunpack.c.h.b16 %v199
    %v866 = vunpack.c.l.b16 %v200
    %v867 = vunpack.c.h.b16 %v200
    %v868 = vunpack.c.l.b16 %v201
    %v869 = vunpack.c.h.b16 %v201
    %v870 = vunpack.c.l.b16 %v202
    %v871 = vunpack.c.h.b16 %v202
    %v872 = vunpack.c.l.b16 %v203
    %v873 = vunpack.c.h.b16 %v203
    %v874 = vunpack.c.l.b16 %v204
    %v875 = vunpack.c.h.b16 %v204
    %v876 = vunpack.c.l.b16 %v205
    %v877 = vunpack.c.h.b16 %v205
    %v878 = vunpack.c.l.b16 %v206
    %v879 = vunpack.c.h.b16 %v206
    %v880 = vunpack.c.l.b16 %v207
    %v881 = vunpack.c.h.b16 %v207
    %v882 = vunpack.c.l.b16 %v208
    %v883 = vunpack.c.h.b16 %v208
    %v884 = vunpack.c.l.b16 %v209
    %v885 = vunpack.c.h.b16 %v209
    %v886 = vunpack.c.l.b16 %v210
    %v887 = vunpack.c.h.b16 %v210
    %v888 = vunpack.c.l.b16 %v211
    %v889 = vunpack.c.h.b16 %v211
    %v890 = vunpack.c.l.b16 %v212
    %v891 = vunpack.c.h.b16 %v212
    %v892 = vunpack.c.l.b16 %v213
    %v893 = vunpack.c.h.b16 %v213
    %v894 = vunpack.c.l.b16 %v214
    %v895 = vunpack.c.h.b16 %v214
    %v896 = vunpack.c.l.b16 %v215
    %v897 = vunpack.c.h.b16 %v215
    %v898 = vunpack.c.l.b16 %v216
    %v899 = vunpack.c.h.b16 %v216
    %v900 = vunpack.c.l.b16 %v217
    %v901 = vunpack.c.h.b16 %v217
    %v902 = vunpack.c.l.b16 %v218
    %v903 = vunpack.c.h.b16 %v218
    %v904 = vunpack.c.l.b16 %v219
    %v905 = vunpack.c.h.b16 %v219
    %v906 = vunpack.c.l.b16 %v220
    %v907 = vunpack.c.h.b16 %v220
    %v908 = vunpack.c.l.b16 %v221
    %v909 = vunpack.c.h.b16 %v221
    %v910 = vunpack.c.l.b16 %v222
    %v911 = vunpack.c.h.b16 %v222
    %v912 = vunpack.c.l.b16 %v223
    %v913 = vunpack.c.h.b16 %v223
    %v914 = vunpack.c.l.b16 %v224
    %v915 = vunpack.c.h.b16 %v224
    %v916 = vunpack.c.l.b16 %v225
    %v917 = vunpack.c.h.b16 %v225
    %v918 = vunpack.c.l.b16 %v226
    %v919 = vunpack.c.h.b16 %v226
    %v920 = vunpack.c.l.b16 %v227
    %v921 = vunpack.c.h.b16 %v227
    %v922 = vunpack.c.l.b16 %v228
    %v923 = vunpack.c.h.b16 %v228
    %v924 = vunpack.c.l.b16 %v229
    %v925 = vunpack.c.h.b16 %v229
    %v926 = vunpack.c.l.b16 %v230
    %v927 = vunpack.c.h.b16 %v230
    %v928 = vunpack.c.l.b16 %v231
    %v929 = vunpack.c.h.b16 %v231
    %v930 = vunpack.c.l.b16 %v232
    %v931 = vunpack.c.h.b16 %v232
    %v932 = vunpack.c.l.b16 %v233
    %v933 = vunpack.c.h.b16 %v233
    %v934 = vunpack.c.l.b16 %v234
    %v935 = vunpack.c.h.b16 %v234
    %v936 = vunpack.c.l.b16 %v235
    %v937 = vunpack.c.h.b16 %v235
    %v938 = vunpack.c.l.b16 %v236
    %v939 = vunpack.c.h.b16 %v236
    %v940 = vunpack.c.l.b16 %v237
    %v941 = vunpack.c.h.b16 %v237
    %v942 = vunpack.c.l.b16 %v238
    %v943 = vunpack.c.h.b16 %v238
    %v944 = vunpack.c.l.b16 %v239
    %v945 = vunpack.c.h.b16 %v239
    %v946 = vunpack.c.l.b16 %v240
    %v947 = vunpack.c.h.b16 %v240
    %v948 = vunpack.c.l.b16 %v241
    %v949 = vunpack.c.h.b16 %v241
    %v950 = vunpack.c.l.b16 %v242
    %v951 = vunpack.c.h.b16 %v242
    %v952 = vunpack.c.l.b16 %v243
    %v953 = vunpack.c.h.b16 %v243
    %v954 = vunpack.c.l.b16 %v244
    %v955 = vunpack.c.h.b16 %v244
    %v956 = vunpack.c.l.b16 %v245
    %v957 = vunpack.c.h.b16 %v245
    %v958 = vunpack.c.l.b16 %v246
    %v959 = vunpack.c.h.b16 %v246
    %v960 = vunpack.c.l.b16 %v247
    %v961 = vunpack.c.h.b16 %v247
    %v962 = vunpack.c.l.b16 %v248
    %v963 = vunpack.c.h.b16 %v248
    %v964 = vunpack.c.l.b16 %v249
    %v965 = vunpack.c.h.b16 %v249
    %v966 = vunpack.c.l.b16 %v250
    %v967 = vunpack.c.h.b16 %v250
    %v968 = vunpack.c.l.b16 %v251
    %v969 = vunpack.c.h.b16 %v251
    %v970 = vunpack.c.l.b16 %v252
    %v971 = vunpack.c.h.b16 %v252
    %v972 = vunpack.c.l.b16 %v253
    %v973 = vunpack.c.h.b16 %v253
    %v974 = vunpack.c.l.b16 %v254
    %v975 = vunpack.c.h.b16 %v254
    %v976 = vunpack.c.l.b16 %v255
    %v977 = vunpack.c.h.b16 %v255
    %v978 = vunpack.c.l.b16 %v256
    %v979 = vunpack.c.h.b16 %v256
    %v980 = vunpack.c.l.b16 %v257
    %v981 = vunpack.c.h.b16 %v257
    %v982 = vunpack.c.l.b16 %v258
    %v983 = vunpack.c.h.b16 %v258
    %v984 = vunpack.c.l.b16 %v259
    %v985 = vunpack.c.h.b16 %v259
    %v986 = vunpack.c.l.b16 %v260
    %v987 = vunpack.c.h.b16 %v260
    %v988 = vunpack.c.l.b16 %v261
    %v989 = vunpack.c.h.b16 %v261
    %v990 = vunpack.c.l.b16 %v262
    %v991 = vunpack.c.h.b16 %v262
    %v992 = vunpack.c.l.b16 %v263
    %v993 = vunpack.c.h.b16 %v263
    %v994 = vunpack.c.l.b16 %v264
    %v995 = vunpack.c.h.b16 %v264
    %v996 = vunpack.c.l.b16 %v265
    %v997 = vunpack.c.h.b16 %v265
    %v998 = vunpack.c.l.b16 %v266
    %v999 = vunpack.c.h.b16 %v266
    %v1000 = vunpack.c.l.b16 %v267
    %v1001 = vunpack.c.h.b16 %v267
    %v1002 = vunpack.c.l.b16 %v268
    %v1003 = vunpack.c.h.b16 %v268
    %v1004 = vunpack.c.l.b16 %v269
    %v1005 = vunpack.c.h.b16 %v269
    %v1006 = vunpack.c.l.b16 %v270
    %v1007 = vunpack.c.h.b16 %v270
    %v1008 = vunpack.c.l.b16 %v271
    %v1009 = vunpack.c.h.b16 %v271
    %v1010 = vunpack.c.l.b16 %v272
    %v1011 = vunpack.c.h.b16 %v272
    %v1012 = vunpack.c.l.b16 %v273
    %v1013 = vunpack.c.h.b16 %v273
    %v1014 = vunpack.c.l.b16 %v274
    %v1015 = vunpack.c.h.b16 %v274
    %v1016 = vunpack.c.l.b16 %v275
    %v1017 = vunpack.c.h.b16 %v275
    %v1018 = vunpack.c.l.b16 %v276
    %v1019 = vunpack.c.h.b16 %v276
    %v1020 = vunpack.c.l.b16 %v277
    %v1021 = vunpack.c.h.b16 %v277
    %v1022 = vunpack.c.l.b16 %v278
    %v1023 = vunpack.c.h.b16 %v278
    %v1024 = vunpack.c.l.b16 %v279
    %v1025 = vunpack.c.h.b16 %v279
    %v1026 = vunpack.c.l.b16 %v280
    %v1027 = vunpack.c.h.b16 %v280
    %v1028 = vunpack.c.l.b16 %v281
    %v1029 = vunpack.c.h.b16 %v281
    %v1030 = vunpack.c.l.b16 %v282
    %v1031 = vunpack.c.h.b16 %v282
    %v1032 = vunpack.c.l.b16 %v283
    %v1033 = vunpack.c.h.b16 %v283
    %v1034 = vunpack.c.l.b16 %v284
    %v1035 = vunpack.c.h.b16 %v284
    %v1036 = vunpack.c.l.b16 %v285
    %v1037 = vunpack.c.h.b16 %v285
    %v1038 = vunpack.c.l.b16 %v286
    %v1039 = vunpack.c.h.b16 %v286
    %v1040 = vunpack.c.l.b16 %v287
    %v1041 = vunpack.c.h.b16 %v287
    %v1042 = vunpack.c.l.b16 %v288
    %v1043 = vunpack.c.h.b16 %v288
    %v1044 = vunpack.c.l.b16 %v289
    %v1045 = vunpack.c.h.b16 %v289
    %v1046 = vunpack.c.l.b16 %v290
    %v1047 = vunpack.c.h.b16 %v290
    %v1048 = vunpack.c.l.b16 %v291
    %v1049 = vunpack.c.h.b16 %v291
    %v1050 = vunpack.c.l.b16 %v292
    %v1051 = vunpack.c.h.b16 %v292
    %v1052 = vunpack.c.l.b16 %v293
    %v1053 = vunpack.c.h.b16 %v293
    %v1054 = vunpack.c.l.b16 %v294
    %v1055 = vunpack.c.h.b16 %v294
    %v1056 = vunpack.c.l.b16 %v295
    %v1057 = vunpack.c.h.b16 %v295
    %v1058 = vunpack.c.l.b16 %v296
    %v1059 = vunpack.c.h.b16 %v296
    %v1060 = vunpack.c.l.b16 %v297
    %v1061 = vunpack.c.h.b16 %v297
    %v1062 = vunpack.c.l.b16 %v298
    %v1063 = vunpack.c.h.b16 %v298
    %v1064 = vunpack.c.l.b16 %v299
    %v1065 = vunpack.c.h.b16 %v299
    %v1066 = vunpack.c.l.b16 %v300
    %v1067 = vunpack.c.h.b16 %v300
    %v1068 = vunpack.c.l.b16 %v301
    %v1069 = vunpack.c.h.b16 %v301
    %v1070 = vunpack.c.l.b16 %v302
    %v1071 = vunpack.c.h.b16 %v302
    %v1072 = vunpack.c.l.b16 %v303
    %v1073 = vunpack.c.h.b16 %v303
    %v1074 = vunpack.c.l.b16 %v304
    %v1075 = vunpack.c.h.b16 %v304
    %v1076 = vunpack.c.l.b16 %v305
    %v1077 = vunpack.c.h.b16 %v305
    %v1078 = vunpack.c.l.b16 %v306
    %v1079 = vunpack.c.h.b16 %v306
    %v1080 = vunpack.c.l.b16 %v307
    %v1081 = vunpack.c.h.b16 %v307
    %v1082 = vunpack.c.l.b16 %v308
    %v1083 = vunpack.c.h.b16 %v308
    %v1084 = vunpack.c.l.b16 %v309
    %v1085 = vunpack.c.h.b16 %v309
    %v1086 = vunpack.c.l.b16 %v310
    %v1087 = vunpack.c.h.b16 %v310
    %v1088 = vunpack.c.l.b16 %v311
    %v1089 = vunpack.c.h.b16 %v311
    %v1090 = vunpack.c.l.b16 %v312
    %v1091 = vunpack.c.h.b16 %v312
    %v1092 = vunpack.c.l.b16 %v313
    %v1093 = vunpack.c.h.b16 %v313
    %v1094 = vunpack.c.l.b16 %v314
    %v1095 = vunpack.c.h.b16 %v314
    %v1096 = vunpack.c.l.b16 %v315
    %v1097 = vunpack.c.h.b16 %v315
    %v1098 = vunpack.c.l.b16 %v316
    %v1099 = vunpack.c.h.b16 %v316
    %v1100 = vunpack.c.l.b16 %v317
    %v1101 = vunpack.c.h.b16 %v317
    %v1102 = vunpack.c.l.b16 %v318
    %v1103 = vunpack.c.h.b16 %v318
    %v1104 = vunpack.c.l.b16 %v319
    %v1105 = vunpack.c.h.b16 %v319
    %v1106 = vunpack.c.l.b16 %v320
    %v1107 = vunpack.c.h.b16 %v320
    %v1108 = vunpack.c.l.b16 %v321
    %v1109 = vunpack.c.h.b16 %v321
    %v1110 = vunpack.c.l.b16 %v322
    %v1111 = vunpack.c.h.b16 %v322
    %v1112 = vunpack.c.l.b16 %v323
    %v1113 = vunpack.c.h.b16 %v323
    %v1114 = vunpack.c.l.b16 %v324
    %v1115 = vunpack.c.h.b16 %v324
    %v1116 = vunpack.c.l.b16 %v325
    %v1117 = vunpack.c.h.b16 %v325
    %v1118 = vunpack.c.l.b16 %v326
    %v1119 = vunpack.c.h.b16 %v326
    %v1120 = vunpack.c.l.b16 %v327
    %v1121 = vunpack.c.h.b16 %v327
    %v1122 = vunpack.c.l.b16 %v328
    %v1123 = vunpack.c.h.b16 %v328
    %v1124 = vunpack.c.l.b16 %v329
    %v1125 = vunpack.c.h.b16 %v329
    %v1126 = vunpack.c.l.b16 %v330
    %v1127 = vunpack.c.h.b16 %v330
    %v1128 = vunpack.c.l.b16 %v331
    %v1129 = vunpack.c.h.b16 %v331
    %v1130 = vunpack.c.l.b16 %v332
    %v1131 = vunpack.c.h.b16 %v332
    %v1132 = vunpack.c.l.b16 %v333
    %v1133 = vunpack.c.h.b16 %v333
    %v1134 = vunpack.c.l.b16 %v334
    %v1135 = vunpack.c.h.b16 %v334
    %v1136 = vunpack.c.l.b16 %v335
    %v1137 = vunpack.c.h.b16 %v335
    %v1138 = vunpack.c.l.b16 %v336
    %v1139 = vunpack.c.h.b16 %v336
    %v1140 = vunpack.c.l.b16 %v337
    %v1141 = vunpack.c.h.b16 %v337
    %v1142 = vunpack.c.l.b16 %v338
    %v1143 = vunpack.c.h.b16 %v338
    %v1144 = vunpack.c.l.b16 %v339
    %v1145 = vunpack.c.h.b16 %v339
    %v1146 = vunpack.c.l.b16 %v340
    %v1147 = vunpack.c.h.b16 %v340
    %v1148 = vunpack.c.l.b16 %v341
    %v1149 = vunpack.c.h.b16 %v341
    %v1150 = vunpack.c.l.b16 %v342
    %v1151 = vunpack.c.h.b16 %v342
    %v1152 = vunpack.c.l.b16 %v343
    %v1153 = vunpack.c.h.b16 %v343
    %v1154 = vunpack.c.l.b16 %v344
    %v1155 = vunpack.c.h.b16 %v344
    %v1156 = vunpack.c.l.b16 %v345
    %v1157 = vunpack.c.h.b16 %v345
    %v1158 = vunpack.c.l.b16 %v346
    %v1159 = vunpack.c.h.b16 %v346
    %v1160 = vunpack.c.l.b16 %v347
    %v1161 = vunpack.c.h.b16 %v347
    %v1162 = vunpack.c.l.b16 %v348
    %v1163 = vunpack.c.h.b16 %v348
    %v1164 = vunpack.c.l.b16 %v349
    %v1165 = vunpack.c.h.b16 %v349
    %v1166 = vunpack.c.l.b16 %v350
    %v1167 = vunpack.c.h.b16 %v350
    %v1168 = vunpack.c.l.b16 %v351
    %v1169 = vunpack.c.h.b16 %v351
    %v1170 = vunpack.c.l.b16 %v352
    %v1171 = vunpack.c.h.b16 %v352
    %v1172 = vunpack.c.l.b16 %v353
    %v1173 = vunpack.c.h.b16 %v353
    %v1174 = vunpack.c.l.b16 %v354
    %v1175 = vunpack.c.h.b16 %v354
    %v1176 = vunpack.c.l.b16 %v355
    %v1177 = vunpack.c.h.b16 %v355
    %v1178 = vunpack.c.l.b16 %v356
    %v1179 = vunpack.c.h.b16 %v356
    %v1180 = vunpack.c.l.b16 %v357
    %v1181 = vunpack.c.h.b16 %v357
    %v1182 = vunpack.c.l.b16 %v358
    %v1183 = vunpack.c.h.b16 %v358
    %v1184 = vunpack.c.l.b16 %v359
    %v1185 = vunpack.c.h.b16 %v359
    %v1186 = vunpack.c.l.b16 %v360
    %v1187 = vunpack.c.h.b16 %v360
    %v1188 = vunpack.c.l.b16 %v361
    %v1189 = vunpack.c.h.b16 %v361
    %v1190 = vunpack.c.l.b16 %v362
    %v1191 = vunpack.c.h.b16 %v362
    %v1192 = vunpack.c.l.b16 %v363
    %v1193 = vunpack.c.h.b16 %v363
    %v1194 = vunpack.c.l.b16 %v364
    %v1195 = vunpack.c.h.b16 %v364
    %v1196 = vunpack.c.l.b16 %v365
    %v1197 = vunpack.c.h.b16 %v365
    %v1198 = vunpack.c.l.b16 %v366
    %v1199 = vunpack.c.h.b16 %v366
    %v1200 = vunpack.c.l.b16 %v367
    %v1201 = vunpack.c.h.b16 %v367
    %v1202 = vunpack.c.l.b16 %v368
    %v1203 = vunpack.c.h.b16 %v368
    %v1204 = vunpack.c.l.b16 %v369
    %v1205 = vunpack.c.h.b16 %v369
    %v1206 = vunpack.c.l.b16 %v370
    %v1207 = vunpack.c.h.b16 %v370
    %v1208 = vunpack.c.l.b16 %v371
    %v1209 = vunpack.c.h.b16 %v371
    %v1210 = vunpack.c.l.b16 %v372
    %v1211 = vunpack.c.h.b16 %v372
    %v1212 = vunpack.c.l.b16 %v373
    %v1213 = vunpack.c.h.b16 %v373
    %v1214 = vunpack.c.l.b16 %v374
    %v1215 = vunpack.c.h.b16 %v374
    %v1216 = vunpack.c.l.b16 %v375
    %v1217 = vunpack.c.h.b16 %v375
    %v1218 = vunpack.c.l.b16 %v376
    %v1219 = vunpack.c.h.b16 %v376
    %v1220 = vunpack.c.l.b16 %v377
    %v1221 = vunpack.c.h.b16 %v377
    %v1222 = vunpack.c.l.b16 %v378
    %v1223 = vunpack.c.h.b16 %v378
    %v1224 = vunpack.c.l.b16 %v379
    %v1225 = vunpack.c.h.b16 %v379
    %v1226 = vunpack.c.l.b16 %v380
    %v1227 = vunpack.c.h.b16 %v380
    %v1228 = vunpack.c.l.b16 %v381
    %v1229 = vunpack.c.h.b16 %v381
    %v1230 = vunpack.c.l.b16 %v382
    %v1231 = vunpack.c.h.b16 %v382
    %v1232 = vunpack.c.l.b16 %v383
    %v1233 = vunpack.c.h.b16 %v383
    %v1234 = vunpack.c.l.b16 %v384
    %v1235 = vunpack.c.h.b16 %v384
    %v1236 = vunpack.c.l.b16 %v385
    %v1237 = vunpack.c.h.b16 %v385
    %v1238 = vunpack.c.l.b16 %v386
    %v1239 = vunpack.c.h.b16 %v386
    %v1240 = vunpack.c.l.b16 %v387
    %v1241 = vunpack.c.h.b16 %v387
    %v1242 = vunpack.c.l.b16 %v388
    %v1243 = vunpack.c.h.b16 %v388
    %v1244 = vunpack.c.l.b16 %v389
    %v1245 = vunpack.c.h.b16 %v389
    %v1246 = vunpack.c.l.b16 %v390
    %v1247 = vunpack.c.h.b16 %v390
    %v1248 = vunpack.c.l.b16 %v391
    %v1249 = vunpack.c.h.b16 %v391
    %v1250 = vunpack.c.l.b16 %v392
    %v1251 = vunpack.c.h.b16 %v392
    %v1252 = vunpack.c.l.b16 %v393
    %v1253 = vunpack.c.h.b16 %v393
    %v1254 = vunpack.c.l.b16 %v394
    %v1255 = vunpack.c.h.b16 %v394
    %v1256 = vunpack.c.l.b16 %v395
    %v1257 = vunpack.c.h.b16 %v395
    %v1258 = vunpack.c.l.b16 %v396
    %v1259 = vunpack.c.h.b16 %v396
    %v1260 = vunpack.c.l.b16 %v397
    %v1261 = vunpack.c.h.b16 %v397
    %v1262 = vunpack.c.l.b16 %v398
    %v1263 = vunpack.c.h.b16 %v398
    %v1264 = vunpack.c.l.b16 %v399
    %v1265 = vunpack.c.h.b16 %v399
    %v1266 = vunpack.c.l.b16 %v400
    %v1267 = vunpack.c.h.b16 %v400
    %v1268 = vunpack.c.l.b16 %v401
    %v1269 = vunpack.c.h.b16 %v401
    %v1270 = vunpack.c.l.b16 %v402
    %v1271 = vunpack.c.h.b16 %v402
    %v1272 = vunpack.c.l.b16 %v403
    %v1273 = vunpack.c.h.b16 %v403
    %v1274 = vunpack.c.l.b16 %v404
    %v1275 = vunpack.c.h.b16 %v404
    %v1276 = vunpack.c.l.b16 %v405
    %v1277 = vunpack.c.h.b16 %v405
    %v1278 = vunpack.c.l.b16 %v406
    %v1279 = vunpack.c.h.b16 %v406
    %v1280 = vunpack.c.l.b16 %v407
    %v1281 = vunpack.c.h.b16 %v407
    %v1282 = vunpack.c.l.b16 %v408
    %v1283 = vunpack.c.h.b16 %v408
    %v1284 = vunpack.c.l.b16 %v409
    %v1285 = vunpack.c.h.b16 %v409
    %v1286 = vunpack.c.l.b16 %v410
    %v1287 = vunpack.c.h.b16 %v410
    %v1288 = vunpack.c.l.b16 %v411
    %v1289 = vunpack.c.h.b16 %v411
    %v1290 = vunpack.c.l.b16 %v412
    %v1291 = vunpack.c.h.b16 %v412
    %v1292 = vunpack.c.l.b16 %v413
    %v1293 = vunpack.c.h.b16 %v413
    %v1294 = vunpack.c.l.b16 %v414
    %v1295 = vunpack.c.h.b16 %v414
    %v1296 = vunpack.c.l.b16 %v415
    %v1297 = vunpack.c.h.b16 %v415
    %v1298 = vunpack.c.l.b16 %v416
    %v1299 = vunpack.c.h.b16 %v416
    %v1300 = vunpack.c.l.b16 %v417
    %v1301 = vunpack.c.h.b16 %v417
    %v1302 = vunpack.c.l.b16 %v418
    %v1303 = vunpack.c.h.b16 %v418
    %v1304 = vunpack.c.l.b16 %v419
    %v1305 = vunpack.c.h.b16 %v419
    %v1306 = vunpack.c.l.b16 %v420
    %v1307 = vunpack.c.h.b16 %v420
    %v1308 = vunpack.c.l.b16 %v421
    %v1309 = vunpack.c.h.b16 %v421
    %v1310 = vunpack.c.l.b16 %v422
    %v1311 = vunpack.c.h.b16 %v422
    %v1312 = vunpack.c.l.b16 %v423
    %v1313 = vunpack.c.h.b16 %v423
    %v1314 = vunpack.c.l.b16 %v424
    %v1315 = vunpack.c.h.b16 %v424
    %v1316 = vunpack.c.l.b16 %v425
    %v1317 = vunpack.c.h.b16 %v425
    %v1318 = vunpack.c.l.b16 %v426
    %v1319 = vunpack.c.h.b16 %v426
    %v1320 = vunpack.c.l.b16 %v427
    %v1321 = vunpack.c.h.b16 %v427
    %v1322 = vunpack.c.l.b16 %v428
    %v1323 = vunpack.c.h.b16 %v428
    %v1324 = vunpack.c.l.b16 %v429
    %v1325 = vunpack.c.h.b16 %v429
    %v1326 = vunpack.c.l.b16 %v430
    %v1327 = vunpack.c.h.b16 %v430
    %v1328 = vunpack.c.l.b16 %v431
    %v1329 = vunpack.c.h.b16 %v431
    %v1330 = vunpack.c.l.b16 %v432
    %v1331 = vunpack.c.h.b16 %v432
    %v1332 = vunpack.c.l.b16 %v433
    %v1333 = vunpack.c.h.b16 %v433
    %v1334 = vunpack.c.l.b16 %v434
    %v1335 = vunpack.c.h.b16 %v434
    %v1336 = vunpack.c.l.b16 %v435
    %v1337 = vunpack.c.h.b16 %v435
    %v1338 = vunpack.c.l.b16 %v436
    %v1339 = vunpack.c.h.b16 %v436
    %v1340 = vunpack.c.l.b16 %v437
    %v1341 = vunpack.c.h.b16 %v437
    %v1342 = vunpack.c.l.b16 %v438
    %v1343 = vunpack.c.h.b16 %v438
    %v1344 = vunpack.c.l.b16 %v439
    %v1345 = vunpack.c.h.b16 %v439
    %v1346 = vunpack.c.l.b16 %v440
    %v1347 = vunpack.c.h.b16 %v440
    %v1348 = vunpack.c.l.b16 %v441
    %v1349 = vunpack.c.h.b16 %v441
    %v1350 = vunpack.c.l.b16 %v442
    %v1351 = vunpack.c.h.b16 %v442
    %v1352 = vunpack.c.l.b16 %v443
    %v1353 = vunpack.c.h.b16 %v443
    %v1354 = vunpack.c.l.b16 %v444
    %v1355 = vunpack.c.h.b16 %v444
    %v1356 = vunpack.c.l.b16 %v445
    %v1357 = vunpack.c.h.b16 %v445
    %v1358 = vunpack.c.l.b16 %v446
    %v1359 = vunpack.c.h.b16 %v446
    %v1360 = vunpack.c.l.b16 %v447
    %v1361 = vunpack.c.h.b16 %v447
    %v1362 = vunpack.c.l.b16 %v448
    %v1363 = vunpack.c.h.b16 %v448
    %v1364 = vunpack.c.l.b16 %v449
    %v1365 = vunpack.c.h.b16 %v449
    %v1366 = vunpack.c.l.b16 %v450
    %v1367 = vunpack.c.h.b16 %v450
    %v1368 = vunpack.c.l.b16 %v451
    %v1369 = vunpack.c.h.b16 %v451
    %v1370 = vunpack.c.l.b16 %v452
    %v1371 = vunpack.c.h.b16 %v452
    %v1372 = vunpack.c.l.b16 %v453
    %v1373 = vunpack.c.h.b16 %v453
    %v1374 = vunpack.c.l.b16 %v454
    %v1375 = vunpack.c.h.b16 %v454
    %v1376 = vunpack.c.l.b16 %v455
    %v1377 = vunpack.c.h.b16 %v455
    %v1378 = vunpack.c.l.b16 %v456
    %v1379 = vunpack.c.h.b16 %v456
    %v1380 = vunpack.c.l.b16 %v457
    %v1381 = vunpack.c.h.b16 %v457
    %v1382 = vunpack.c.l.b16 %v458
    %v1383 = vunpack.c.h.b16 %v458
    %v1384 = vunpack.c.l.b16 %v459
    %v1385 = vunpack.c.h.b16 %v459
    %v1386 = vunpack.c.l.b16 %v460
    %v1387 = vunpack.c.h.b16 %v460
    %v1388 = vunpack.c.l.b16 %v461
    %v1389 = vunpack.c.h.b16 %v461
    %v1390 = vunpack.c.l.b16 %v462
    %v1391 = vunpack.c.h.b16 %v462
    %v1392 = vunpack.c.l.b16 %v463
    %v1393 = vunpack.c.h.b16 %v463
    %v1394 = vunpack.c.l.b16 %v464
    %v1395 = vunpack.c.h.b16 %v464
    %v1396 = vunpack.c.l.b16 %v465
    %v1397 = vunpack.c.h.b16 %v465
    %v1398 = vunpack.c.l.b16 %v466
    %v1399 = vunpack.c.h.b16 %v466
    %v1400 = vunpack.c.l.b16 %v467
    %v1401 = vunpack.c.h.b16 %v467
    %v1402 = vunpack.c.l.b16 %v468
    %v1403 = vunpack.c.h.b16 %v468
    %v1404 = vunpack.c.l.b16 %v469
    %v1405 = vunpack.c.h.b16 %v469
    %v1406 = vunpack.c.l.b16 %v470
    %v1407 = vunpack.c.h.b16 %v470
    %v1408 = vunpack.c.l.b16 %v471
    %v1409 = vunpack.c.h.b16 %v471
    %v1410 = vunpack.c.l.b16 %v472
    %v1411 = vunpack.c.h.b16 %v472
    %v1412 = vunpack.c.l.b16 %v473
    %v1413 = vunpack.c.h.b16 %v473
    %v1414 = vunpack.c.l.b16 %v474
    %v1415 = vunpack.c.h.b16 %v474
    %v1416 = vunpack.c.l.b16 %v475
    %v1417 = vunpack.c.h.b16 %v475
    %v1418 = vunpack.c.l.b16 %v476
    %v1419 = vunpack.c.h.b16 %v476
    %v1420 = vunpack.c.l.b16 %v477
    %v1421 = vunpack.c.h.b16 %v477
    %v1422 = vunpack.c.l.b16 %v478
    %v1423 = vunpack.c.h.b16 %v478
    %v1424 = vunpack.c.l.b16 %v479
    %v1425 = vunpack.c.h.b16 %v479
    %v1426 = vunpack.c.l.b16 %v480
    %v1427 = vunpack.c.h.b16 %v480
    %v1428 = vunpack.c.l.b16 %v481
    %v1429 = vunpack.c.h.b16 %v481
    %v1430 = vunpack.c.l.b16 %v482
    %v1431 = vunpack.c.h.b16 %v482
    %v1432 = vunpack.c.l.b16 %v483
    %v1433 = vunpack.c.h.b16 %v483
    %v1434 = vunpack.c.l.b16 %v484
    %v1435 = vunpack.c.h.b16 %v484
    %v1436 = vunpack.c.l.b16 %v485
    %v1437 = vunpack.c.h.b16 %v485
    %v1438 = vunpack.c.l.b16 %v486
    %v1439 = vunpack.c.h.b16 %v486
    %v1440 = vunpack.c.l.b16 %v487
    %v1441 = vunpack.c.h.b16 %v487
    %v1442 = vunpack.c.l.b16 %v488
    %v1443 = vunpack.c.h.b16 %v488
    %v1444 = vunpack.c.l.b16 %v489
    %v1445 = vunpack.c.h.b16 %v489
    %v1446 = vunpack.c.l.b16 %v490
    %v1447 = vunpack.c.h.b16 %v490
    %v1448 = vunpack.c.l.b16 %v491
    %v1449 = vunpack.c.h.b16 %v491
    %v1450 = vunpack.c.l.b16 %v492
    %v1451 = vunpack.c.h.b16 %v492
    %v1452 = vunpack.c.l.b16 %v493
    %v1453 = vunpack.c.h.b16 %v493
    %v1454 = vpack.c.b16 %v818, %v814
    %v1455 = vpack.c.b16 %v819, %v815
    %v1456 = vpack.c.b16 %v820, %v816
    %v1457 = vpack.c.b16 %v821, %v817
    %v1458 = vpack.c.b16 %v826, %v822
    %v1459 = vpack.c.b16 %v827, %v823
    %v1460 = vpack.c.b16 %v828, %v824
    %v1461 = vpack.c.b16 %v829, %v825
    %v1462 = vpack.c.b16 %v834, %v830
    %v1463 = vpack.c.b16 %v835, %v831
    %v1464 = vpack.c.b16 %v836, %v832
    %v1465 = vpack.c.b16 %v837, %v833
    %v1466 = vpack.c.b16 %v842, %v838
    %v1467 = vpack.c.b16 %v843, %v839
    %v1468 = vpack.c.b16 %v844, %v840
    %v1469 = vpack.c.b16 %v845, %v841
    %v1470 = vpack.c.b16 %v850, %v846
    %v1471 = vpack.c.b16 %v851, %v847
    %v1472 = vpack.c.b16 %v852, %v848
    %v1473 = vpack.c.b16 %v853, %v849
    %v1474 = vpack.c.b16 %v858, %v854
    %v1475 = vpack.c.b16 %v859, %v855
    %v1476 = vpack.c.b16 %v860, %v856
    %v1477 = vpack.c.b16 %v861, %v857
    %v1478 = vpack.c.b16 %v866, %v862
    %v1479 = vpack.c.b16 %v867, %v863
    %v1480 = vpack.c.b16 %v868, %v864
    %v1481 = vpack.c.b16 %v869, %v865
    %v1482 = vpack.c.b16 %v874, %v870
    %v1483 = vpack.c.b16 %v875, %v871
    %v1484 = vpack.c.b16 %v876, %v872
    %v1485 = vpack.c.b16 %v877, %v873
    %v1486 = vpack.c.b16 %v882, %v878
    %v1487 = vpack.c.b16 %v883, %v879
    %v1488 = vpack.c.b16 %v884, %v880
    %v1489 = vpack.c.b16 %v885, %v881
    %v1490 = vpack.c.b16 %v890, %v886
    %v1491 = vpack.c.b16 %v891, %v887
    %v1492 = vpack.c.b16 %v892, %v888
    %v1493 = vpack.c.b16 %v893, %v889
    %v1494 = vpack.c.b16 %v898, %v894
    %v1495 = vpack.c.b16 %v899, %v895
    %v1496 = vpack.c.b16 %v900, %v896
    %v1497 = vpack.c.b16 %v901, %v897
    %v1498 = vpack.c.b16 %v906, %v902
    %v1499 = vpack.c.b16 %v907, %v903
    %v1500 = vpack.c.b16 %v908, %v904
    %v1501 = vpack.c.b16 %v909, %v905
    %v1502 = vpack.c.b16 %v914, %v910
    %v1503 = vpack.c.b16 %v915, %v911
    %v1504 = vpack.c.b16 %v916, %v912
    %v1505 = vpack.c.b16 %v917, %v913
    %v1506 = vpack.c.b16 %v922, %v918
    %v1507 = vpack.c.b16 %v923, %v919
    %v1508 = vpack.c.b16 %v924, %v920
    %v1509 = vpack.c.b16 %v925, %v921
    %v1510 = vpack.c.b16 %v930, %v926
    %v1511 = vpack.c.b16 %v931, %v927
    %v1512 = vpack.c.b16 %v932, %v928
    %v1513 = vpack.c.b16 %v933, %v929
    %v1514 = vpack.c.b16 %v938, %v934
    %v1515 = vpack.c.b16 %v939, %v935
    %v1516 = vpack.c.b16 %v940, %v936
    %v1517 = vpack.c.b16 %v941, %v937
    %v1518 = vpack.c.b16 %v946, %v942
    %v1519 = vpack.c.b16 %v947, %v943
    %v1520 = vpack.c.b16 %v948, %v944
    %v1521 = vpack.c.b16 %v949, %v945
    %v1522 = vpack.c.b16 %v954, %v950
    %v1523 = vpack.c.b16 %v955, %v951
    %v1524 = vpack.c.b16 %v956, %v952
    %v1525 = vpack.c.b16 %v957, %v953
    %v1526 = vpack.c.b16 %v962, %v958
    %v1527 = vpack.c.b16 %v963, %v959
    %v1528 = vpack.c.b16 %v964, %v960
    %v1529 = vpack.c.b16 %v965, %v961
    %v1530 = vpack.c.b16 %v970, %v966
    %v1531 = vpack.c.b16 %v971, %v967
    %v1532 = vpack.c.b16 %v972, %v968
    %v1533 = vpack.c.b16 %v973, %v969
    %v1534 = vpack.c.b16 %v978, %v974
    %v1535 = vpack.c.b16 %v979, %v975
    %v1536 = vpack.c.b16 %v980, %v976
    %v1537 = vpack.c.b16 %v981, %v977
    %v1538 = vpack.c.b16 %v986, %v982
    %v1539 = vpack.c.b16 %v987, %v983
    %v1540 = vpack.c.b16 %v988, %v984
    %v1541 = vpack.c.b16 %v989, %v985
    %v1542 = vpack.c.b16 %v994, %v990
    %v1543 = vpack.c.b16 %v995, %v991
    %v1544 = vpack.c.b16 %v996, %v992
    %v1545 = vpack.c.b16 %v997, %v993
    %v1546 = vpack.c.b16 %v1002, %v998
    %v1547 = vpack.c.b16 %v1003, %v999
    %v1548 = vpack.c.b16 %v1004, %v1000
    %v1549 = vpack.c.b16 %v1005, %v1001
    %v1550 = vpack.c.b16 %v1010, %v1006
    %v1551 = vpack.c.b16 %v1011, %v1007
    %v1552 = vpack.c.b16 %v1012, %v1008
    %v1553 = vpack.c.b16 %v1013, %v1009
    %v1554 = vpack.c.b16 %v1018, %v1014
    %v1555 = vpack.c.b16 %v1019, %v1015
    %v1556 = vpack.c.b16 %v1020, %v1016
    %v1557 = vpack.c.b16 %v1021, %v1017
    %v1558 = vpack.c.b16 %v1026, %v1022
    %v1559 = vpack.c.b16 %v1027, %v1023
    %v1560 = vpack.c.b16 %v1028, %v1024
    %v1561 = vpack.c.b16 %v1029, %v1025
    %v1562 = vpack.c.b16 %v1034, %v1030
    %v1563 = vpack.c.b16 %v1035, %v1031
    %v1564 = vpack.c.b16 %v1036, %v1032
    %v1565 = vpack.c.b16 %v1037, %v1033
    %v1566 = vpack.c.b16 %v1042, %v1038
    %v1567 = vpack.c.b16 %v1043, %v1039
    %v1568 = vpack.c.b16 %v1044, %v1040
    %v1569 = vpack.c.b16 %v1045, %v1041
    %v1570 = vpack.c.b16 %v1050, %v1046
    %v1571 = vpack.c.b16 %v1051, %v1047
    %v1572 = vpack.c.b16 %v1052, %v1048
    %v1573 = vpack.c.b16 %v1053, %v1049
    %v1574 = vpack.c.b16 %v1058, %v1054
    %v1575 = vpack.c.b16 %v1059, %v1055
    %v1576 = vpack.c.b16 %v1060, %v1056
    %v1577 = vpack.c.b16 %v1061, %v1057
    %v1578 = vpack.c.b16 %v1066, %v1062
    %v1579 = vpack.c.b16 %v1067, %v1063
    %v1580 = vpack.c.b16 %v1068, %v1064
    %v1581 = vpack.c.b16 %v1069, %v1065
    %v1582 = vpack.c.b16 %v1074, %v1070
    %v1583 = vpack.c.b16 %v1075, %v1071
    %v1584 = vpack.c.b16 %v1076, %v1072
    %v1585 = vpack.c.b16 %v1077, %v1073
    %v1586 = vpack.c.b16 %v1082, %v1078
    %v1587 = vpack.c.b16 %v1083, %v1079
    %v1588 = vpack.c.b16 %v1084, %v1080
    %v1589 = vpack.c.b16 %v1085, %v1081
    %v1590 = vpack.c.b16 %v1090, %v1086
    %v1591 = vpack.c.b16 %v1091, %v1087
    %v1592 = vpack.c.b16 %v1092, %v1088
    %v1593 = vpack.c.b16 %v1093, %v1089
    %v1594 = vpack.c.b16 %v1098, %v1094
    %v1595 = vpack.c.b16 %v1099, %v1095
    %v1596 = vpack.c.b16 %v1100, %v1096
    %v1597 = vpack.c.b16 %v1101, %v1097
    %v1598 = vpack.c.b16 %v1106, %v1102
    %v1599 = vpack.c.b16 %v1107, %v1103
    %v1600 = vpack.c.b16 %v1108, %v1104
    %v1601 = vpack.c.b16 %v1109, %v1105
    %v1602 = vpack.c.b16 %v1114, %v1110
    %v1603 = vpack.c.b16 %v1115, %v1111
    %v1604 = vpack.c.b16 %v1116, %v1112
    %v1605 = vpack.c.b16 %v1117, %v1113
    %v1606 = vpack.c.b16 %v1122, %v1118
    %v1607 = vpack.c.b16 %v1123, %v1119
    %v1608 = vpack.c.b16 %v1124, %v1120
    %v1609 = vpack.c.b16 %v1125, %v1121
    %v1610 = vpack.c.b16 %v1130, %v1126
    %v1611 = vpack.c.b16 %v1131, %v1127
    %v1612 = vpack.c.b16 %v1132, %v1128
    %v1613 = vpack.c.b16 %v1133, %v1129
    %v1614 = vpack.c.b16 %v1138, %v1134
    %v1615 = vpack.c.b16 %v1139, %v1135
    %v1616 = vpack.c.b16 %v1140, %v1136
    %v1617 = vpack.c.b16 %v1141, %v1137
    %v1618 = vpack.c.b16 %v1146, %v1142
    %v1619 = vpack.c.b16 %v1147, %v1143
    %v1620 = vpack.c.b16 %v1148, %v1144
    %v1621 = vpack.c.b16 %v1149, %v1145
    %v1622 = vpack.c.b16 %v1154, %v1150
    %v1623 = vpack.c.b16 %v1155, %v1151
    %v1624 = vpack.c.b16 %v1156, %v1152
    %v1625 = vpack.c.b16 %v1157, %v1153
    %v1626 = vpack.c.b16 %v1162, %v1158
    %v1627 = vpack.c.b16 %v1163, %v1159
    %v1628 = vpack.c.b16 %v1164, %v1160
    %v1629 = vpack.c.b16 %v1165, %v1161
    %v1630 = vpack.c.b16 %v1170, %v1166
    %v1631 = vpack.c.b16 %v1171, %v1167
    %v1632 = vpack.c.b16 %v1172, %v1168
    %v1633 = vpack.c.b16 %v1173, %v1169
    %v1634 = vpack.c.b16 %v1178, %v1174
    %v1635 = vpack.c.b16 %v1179, %v1175
    %v1636 = vpack.c.b16 %v1180, %v1176
    %v1637 = vpack.c.b16 %v1181, %v1177
    %v1638 = vpack.c.b16 %v1186, %v1182
    %v1639 = vpack.c.b16 %v1187, %v1183
    %v1640 = vpack.c.b16 %v1188, %v1184
    %v1641 = vpack.c.b16 %v1189, %v1185
    %v1642 = vpack.c.b16 %v1194, %v1190
    %v1643 = vpack.c.b16 %v1195, %v1191
    %v1644 = vpack.c.b16 %v1196, %v1192
    %v1645 = vpack.c.b16 %v1197, %v1193
    %v1646 = vpack.c.b16 %v1202, %v1198
    %v1647 = vpack.c.b16 %v1203, %v1199
    %v1648 = vpack.c.b16 %v1204, %v1200
    %v1649 = vpack.c.b16 %v1205, %v1201
    %v1650 = vpack.c.b16 %v1210, %v1206
    %v1651 = vpack.c.b16 %v1211, %v1207
    %v1652 = vpack.c.b16 %v1212, %v1208
    %v1653 = vpack.c.b16 %v1213, %v1209
    %v1654 = vpack.c.b16 %v1218, %v1214
    %v1655 = vpack.c.b16 %v1219, %v1215
    %v1656 = vpack.c.b16 %v1220, %v1216
    %v1657 = vpack.c.b16 %v1221, %v1217
    %v1658 = vpack.c.b16 %v1226, %v1222
    %v1659 = vpack.c.b16 %v1227, %v1223
    %v1660 = vpack.c.b16 %v1228, %v1224
    %v1661 = vpack.c.b16 %v1229, %v1225
    %v1662 = vpack.c.b16 %v1234, %v1230
    %v1663 = vpack.c.b16 %v1235, %v1231
    %v1664 = vpack.c.b16 %v1236, %v1232
    %v1665 = vpack.c.b16 %v1237, %v1233
    %v1666 = vpack.c.b16 %v1242, %v1238
    %v1667 = vpack.c.b16 %v1243, %v1239
    %v1668 = vpack.c.b16 %v1244, %v1240
    %v1669 = vpack.c.b16 %v1245, %v1241
    %v1670 = vpack.c.b16 %v1250, %v1246
    %v1671 = vpack.c.b16 %v1251, %v1247
    %v1672 = vpack.c.b16 %v1252, %v1248
    %v1673 = vpack.c.b16 %v1253, %v1249
    %v1674 = vpack.c.b16 %v1258, %v1254
    %v1675 = vpack.c.b16 %v1259, %v1255
    %v1676 = vpack.c.b16 %v1260, %v1256
    %v1677 = vpack.c.b16 %v1261, %v1257
    %v1678 = vpack.c.b16 %v1266, %v1262
    %v1679 = vpack.c.b16 %v1267, %v1263
    %v1680 = vpack.c.b16 %v1268, %v1264
    %v1681 = vpack.c.b16 %v1269, %v1265
    %v1682 = vpack.c.b16 %v1274, %v1270
    %v1683 = vpack.c.b16 %v1275, %v1271
    %v1684 = vpack.c.b16 %v1276, %v1272
    %v1685 = vpack.c.b16 %v1277, %v1273
    %v1686 = vpack.c.b16 %v1282, %v1278
    %v1687 = vpack.c.b16 %v1283, %v1279
    %v1688 = vpack.c.b16 %v1284, %v1280
    %v1689 = vpack.c.b16 %v1285, %v1281
    %v1690 = vpack.c.b16 %v1290, %v1286
    %v1691 = vpack.c.b16 %v1291, %v1287
    %v1692 = vpack.c.b16 %v1292, %v1288
    %v1693 = vpack.c.b16 %v1293, %v1289
    %v1694 = vpack.c.b16 %v1298, %v1294
    %v1695 = vpack.c.b16 %v1299, %v1295
    %v1696 = vpack.c.b16 %v1300, %v1296
    %v1697 = vpack.c.b16 %v1301, %v1297
    %v1698 = vpack.c.b16 %v1306, %v1302
    %v1699 = vpack.c.b16 %v1307, %v1303
    %v1700 = vpack.c.b16 %v1308, %v1304
    %v1701 = vpack.c.b16 %v1309, %v1305
    %v1702 = vpack.c.b16 %v1314, %v1310
    %v1703 = vpack.c.b16 %v1315, %v1311
    %v1704 = vpack.c.b16 %v1316, %v1312
    %v1705 = vpack.c.b16 %v1317, %v1313
    %v1706 = vpack.c.b16 %v1322, %v1318
    %v1707 = vpack.c.b16 %v1323, %v1319
    %v1708 = vpack.c.b16 %v1324, %v1320
    %v1709 = vpack.c.b16 %v1325, %v1321
    %v1710 = vpack.c.b16 %v1330, %v1326
    %v1711 = vpack.c.b16 %v1331, %v1327
    %v1712 = vpack.c.b16 %v1332, %v1328
    %v1713 = vpack.c.b16 %v1333, %v1329
    %v1714 = vpack.c.b16 %v1338, %v1334
    %v1715 = vpack.c.b16 %v1339, %v1335
    %v1716 = vpack.c.b16 %v1340, %v1336
    %v1717 = vpack.c.b16 %v1341, %v1337
    %v1718 = vpack.c.b16 %v1346, %v1342
    %v1719 = vpack.c.b16 %v1347, %v1343
    %v1720 = vpack.c.b16 %v1348, %v1344
    %v1721 = vpack.c.b16 %v1349, %v1345
    %v1722 = vpack.c.b16 %v1354, %v1350
    %v1723 = vpack.c.b16 %v1355, %v1351
    %v1724 = vpack.c.b16 %v1356, %v1352
    %v1725 = vpack.c.b16 %v1357, %v1353
    %v1726 = vpack.c.b16 %v1362, %v1358
    %v1727 = vpack.c.b16 %v1363, %v1359
    %v1728 = vpack.c.b16 %v1364, %v1360
    %v1729 = vpack.c.b16 %v1365, %v1361
    %v1730 = vpack.c.b16 %v1370, %v1366
    %v1731 = vpack.c.b16 %v1371, %v1367
    %v1732 = vpack.c.b16 %v1372, %v1368
    %v1733 = vpack.c.b16 %v1373, %v1369
    %v1734 = vpack.c.b16 %v1378, %v1374
    %v1735 = vpack.c.b16 %v1379, %v1375
    %v1736 = vpack.c.b16 %v1380, %v1376
    %v1737 = vpack.c.b16 %v1381, %v1377
    %v1738 = vpack.c.b16 %v1386, %v1382
    %v1739 = vpack.c.b16 %v1387, %v1383
    %v1740 = vpack.c.b16 %v1388, %v1384
    %v1741 = vpack.c.b16 %v1389, %v1385
    %v1742 = vpack.c.b16 %v1394, %v1390
    %v1743 = vpack.c.b16 %v1395, %v1391
    %v1744 = vpack.c.b16 %v1396, %v1392
    %v1745 = vpack.c.b16 %v1397, %v1393
    %v1746 = vpack.c.b16 %v1402, %v1398
    %v1747 = vpack.c.b16 %v1403, %v1399
    %v1748 = vpack.c.b16 %v1404, %v1400
    %v1749 = vpack.c.b16 %v1405, %v1401
    %v1750 = vpack.c.b16 %v1410, %v1406
    %v1751 = vpack.c.b16 %v1411, %v1407
    %v1752 = vpack.c.b16 %v1412, %v1408
    %v1753 = vpack.c.b16 %v1413, %v1409
    %v1754 = vpack.c.b16 %v1418, %v1414
    %v1755 = vpack.c.b16 %v1419, %v1415
    %v1756 = vpack.c.b16 %v1420, %v1416
    %v1757 = vpack.c.b16 %v1421, %v1417
    %v1758 = vpack.c.b16 %v1426, %v1422
    %v1759 = vpack.c.b16 %v1427, %v1423
    %v1760 = vpack.c.b16 %v1428, %v1424
    %v1761 = vpack.c.b16 %v1429, %v1425
    %v1762 = vpack.c.b16 %v1434, %v1430
    %v1763 = vpack.c.b16 %v1435, %v1431
    %v1764 = vpack.c.b16 %v1436, %v1432
    %v1765 = vpack.c.b16 %v1437, %v1433
    %v1766 = vpack.c.b16 %v1442, %v1438
    %v1767 = vpack.c.b16 %v1443, %v1439
    %v1768 = vpack.c.b16 %v1444, %v1440
    %v1769 = vpack.c.b16 %v1445, %v1441
    %v1770 = vpack.c.b16 %v1450, %v1446
    %v1771 = vpack.c.b16 %v1451, %v1447
    %v1772 = vpack.c.b16 %v1452, %v1448
    %v1773 = vpack.c.b16 %v1453, %v1449
    %2094 = vmatprep.subr.bf16.mxu0 %v1455
    %2095 = vmatpush1.bf16.msra.mxu0 %v1454
    %2096 = vmatprep.subr.bf16.mxu0 %v1459
    %2097 = vmatpush1.bf16.msra.mxu0 %v1458
    %2098 = vmatprep.subr.bf16.mxu0 %v1463
    %2099 = vmatpush1.bf16.msra.mxu0 %v1462
    %2100 = vmatprep.subr.bf16.mxu0 %v1467
    %2101 = vmatpush1.bf16.msra.mxu0 %v1466
    %2102 = vmatprep.subr.bf16.mxu0 %v1471
    %2103 = vmatpush1.bf16.msra.mxu0 %v1470
    %2104 = vmatprep.subr.bf16.mxu0 %v1475
    %2105 = vmatpush1.bf16.msra.mxu0 %v1474
    %2106 = vmatprep.subr.bf16.mxu0 %v1479
    %2107 = vmatpush1.bf16.msra.mxu0 %v1478
    %2108 = vmatprep.subr.bf16.mxu0 %v1483
    %2109 = vmatpush1.bf16.msra.mxu0 %v1482
    %2110 = vmatprep.subr.bf16.mxu0 %v1487
    %2111 = vmatpush1.bf16.msra.mxu0 %v1486
    %2112 = vmatprep.subr.bf16.mxu0 %v1491
    %2113 = vmatpush1.bf16.msra.mxu0 %v1490
    %2114 = vmatprep.subr.bf16.mxu0 %v1495
    %2115 = vmatpush1.bf16.msra.mxu0 %v1494
    %2116 = vmatprep.subr.bf16.mxu0 %v1499
    %2117 = vmatpush1.bf16.msra.mxu0 %v1498
    %2118 = vmatprep.subr.bf16.mxu0 %v1503
    %2119 = vmatpush1.bf16.msra.mxu0 %v1502
    %2120 = vmatprep.subr.bf16.mxu0 %v1507
    %2121 = vmatpush1.bf16.msra.mxu0 %v1506
    %2122 = vmatprep.subr.bf16.mxu0 %v1511
    %2123 = vmatpush1.bf16.msra.mxu0 %v1510
    %2124 = vmatprep.subr.bf16.mxu0 %v1515
    %2125 = vmatpush1.bf16.msra.mxu0 %v1514
    %2126 = vmatprep.mubr.bf16.mxu0 %v165
    %2127 = vmatmul.mubr.bf16.gmra.mrb[0].mxu0 %v164
    %v2128 = vpop.f32.mrb[0].mxu0
    %v2129 = vadd.f32 0.0, %v2128
    %v2130 = vpop.f32.mrb[0].mxu0
    %v2131 = vadd.f32 0.0, %v2130
    %v2132 = vpop.f32.mrb[0].mxu0
    %v2133 = vpop.f32.mrb[0].mxu0
    %2134 = vdwg.mxu0
    %2135 = vmatprep.subr.bf16.mxu0 %v1519
    %2136 = vmatpush1.bf16.msra.mxu0 %v1518
    %2137 = vmatprep.subr.bf16.mxu0 %v1523
    %2138 = vmatpush1.bf16.msra.mxu0 %v1522
    %2139 = vmatprep.subr.bf16.mxu0 %v1527
    %2140 = vmatpush1.bf16.msra.mxu0 %v1526
    %2141 = vmatprep.subr.bf16.mxu0 %v1531
    %2142 = vmatpush1.bf16.msra.mxu0 %v1530
    %2143 = vmatprep.subr.bf16.mxu0 %v1535
    %2144 = vmatpush1.bf16.msra.mxu0 %v1534
    %2145 = vmatprep.subr.bf16.mxu0 %v1539
    %2146 = vmatpush1.bf16.msra.mxu0 %v1538
    %2147 = vmatprep.subr.bf16.mxu0 %v1543
    %2148 = vmatpush1.bf16.msra.mxu0 %v1542
    %2149 = vmatprep.subr.bf16.mxu0 %v1547
    %2150 = vmatpush1.bf16.msra.mxu0 %v1546
    %2151 = vmatprep.subr.bf16.mxu0 %v1551
    %2152 = vmatpush1.bf16.msra.mxu0 %v1550
    %2153 = vmatprep.subr.bf16.mxu0 %v1555
    %2154 = vmatpush1.bf16.msra.mxu0 %v1554
    %2155 = vmatprep.subr.bf16.mxu0 %v1559
    %2156 = vmatpush1.bf16.msra.mxu0 %v1558
    %2157 = vmatprep.subr.bf16.mxu0 %v1563
    %2158 = vmatpush1.bf16.msra.mxu0 %v1562
    %2159 = vmatprep.subr.bf16.mxu0 %v1567
    %2160 = vmatpush1.bf16.msra.mxu0 %v1566
    %2161 = vmatprep.subr.bf16.mxu0 %v1571
    %2162 = vmatpush1.bf16.msra.mxu0 %v1570
    %2163 = vmatprep.subr.bf16.mxu0 %v1575
    %2164 = vmatpush1.bf16.msra.mxu0 %v1574
    %2165 = vmatprep.subr.bf16.mxu0 %v1579
    %2166 = vmatpush1.bf16.msra.mxu0 %v1578
    %2167 = vmatprep.mubr.bf16.mxu0 %v167
    %2168 = vmatmul.mubr.bf16.gmra.mrb[0].mxu0 %v166
    %v2169 = vpop.f32.mrb[0].mxu0
    %v2170 = vadd.f32 %v2129, %v2169
    %v2171 = vpop.f32.mrb[0].mxu0
    %v2172 = vadd.f32 %v2131, %v2171
    %v2173 = vpop.f32.mrb[0].mxu0
    %v2174 = vpop.f32.mrb[0].mxu0
    %2175 = vdwg.mxu0
    %2176 = vmatprep.subr.bf16.mxu0 %v1583
    %2177 = vmatpush1.bf16.msra.mxu0 %v1582
    %2178 = vmatprep.subr.bf16.mxu0 %v1587
    %2179 = vmatpush1.bf16.msra.mxu0 %v1586
    %2180 = vmatprep.subr.bf16.mxu0 %v1591
    %2181 = vmatpush1.bf16.msra.mxu0 %v1590
    %2182 = vmatprep.subr.bf16.mxu0 %v1595
    %2183 = vmatpush1.bf16.msra.mxu0 %v1594
    %2184 = vmatprep.subr.bf16.mxu0 %v1599
    %2185 = vmatpush1.bf16.msra.mxu0 %v1598
    %2186 = vmatprep.subr.bf16.mxu0 %v1603
    %2187 = vmatpush1.bf16.msra.mxu0 %v1602
    %2188 = vmatprep.subr.bf16.mxu0 %v1607
    %2189 = vmatpush1.bf16.msra.mxu0 %v1606
    %2190 = vmatprep.subr.bf16.mxu0 %v1611
    %2191 = vmatpush1.bf16.msra.mxu0 %v1610
    %2192 = vmatprep.subr.bf16.mxu0 %v1615
    %2193 = vmatpush1.bf16.msra.mxu0 %v1614
    %2194 = vmatprep.subr.bf16.mxu0 %v1619
    %2195 = vmatpush1.bf16.msra.mxu0 %v1618
    %2196 = vmatprep.subr.bf16.mxu0 %v1623
    %2197 = vmatpush1.bf16.msra.mxu0 %v1622
    %2198 = vmatprep.subr.bf16.mxu0 %v1627
    %2199 = vmatpush1.bf16.msra.mxu0 %v1626
    %2200 = vmatprep.subr.bf16.mxu0 %v1631
    %2201 = vmatpush1.bf16.msra.mxu0 %v1630
    %2202 = vmatprep.subr.bf16.mxu0 %v1635
    %2203 = vmatpush1.bf16.msra.mxu0 %v1634
    %2204 = vmatprep.subr.bf16.mxu0 %v1639
    %2205 = vmatpush1.bf16.msra.mxu0 %v1638
    %2206 = vmatprep.subr.bf16.mxu0 %v1643
    %2207 = vmatpush1.bf16.msra.mxu0 %v1642
    %2208 = vmatprep.mubr.bf16.mxu0 %v169
    %2209 = vmatmul.mubr.bf16.gmra.mrb[0].mxu0 %v168
    %v2210 = vpop.f32.mrb[0].mxu0
    %v2211 = vadd.f32 %v2170, %v2210
    %v2212 = vpop.f32.mrb[0].mxu0
    %v2213 = vadd.f32 %v2172, %v2212
    %v2214 = vpop.f32.mrb[0].mxu0
    %v2215 = vpop.f32.mrb[0].mxu0
    %2216 = vdwg.mxu0
    %2217 = vmatprep.subr.bf16.mxu0 %v1647
    %2218 = vmatpush1.bf16.msra.mxu0 %v1646
    %2219 = vmatprep.subr.bf16.mxu0 %v1651
    %2220 = vmatpush1.bf16.msra.mxu0 %v1650
    %2221 = vmatprep.subr.bf16.mxu0 %v1655
    %2222 = vmatpush1.bf16.msra.mxu0 %v1654
    %2223 = vmatprep.subr.bf16.mxu0 %v1659
    %2224 = vmatpush1.bf16.msra.mxu0 %v1658
    %2225 = vmatprep.subr.bf16.mxu0 %v1663
    %2226 = vmatpush1.bf16.msra.mxu0 %v1662
    %2227 = vmatprep.subr.bf16.mxu0 %v1667
    %2228 = vmatpush1.bf16.msra.mxu0 %v1666
    %2229 = vmatprep.subr.bf16.mxu0 %v1671
    %2230 = vmatpush1.bf16.msra.mxu0 %v1670
    %2231 = vmatprep.subr.bf16.mxu0 %v1675
    %2232 = vmatpush1.bf16.msra.mxu0 %v1674
    %2233 = vmatprep.subr.bf16.mxu0 %v1679
    %2234 = vmatpush1.bf16.msra.mxu0 %v1678
    %2235 = vmatprep.subr.bf16.mxu0 %v1683
    %2236 = vmatpush1.bf16.msra.mxu0 %v1682
    %2237 = vmatprep.subr.bf16.mxu0 %v1687
    %2238 = vmatpush1.bf16.msra.mxu0 %v1686
    %2239 = vmatprep.subr.bf16.mxu0 %v1691
    %2240 = vmatpush1.bf16.msra.mxu0 %v1690
    %2241 = vmatprep.subr.bf16.mxu0 %v1695
    %2242 = vmatpush1.bf16.msra.mxu0 %v1694
    %2243 = vmatprep.subr.bf16.mxu0 %v1699
    %2244 = vmatpush1.bf16.msra.mxu0 %v1698
    %2245 = vmatprep.subr.bf16.mxu0 %v1703
    %2246 = vmatpush1.bf16.msra.mxu0 %v1702
    %2247 = vmatprep.subr.bf16.mxu0 %v1707
    %2248 = vmatpush1.bf16.msra.mxu0 %v1706
    %2249 = vmatprep.mubr.bf16.mxu0 %v171
    %2250 = vmatmul.mubr.bf16.gmra.mrb[0].mxu0 %v170
    %v2251 = vpop.f32.mrb[0].mxu0
    %v2252 = vadd.f32 %v2211, %v2251
    %v2253 = vpop.f32.mrb[0].mxu0
    %v2254 = vadd.f32 %v2213, %v2253
    %v2255 = vpop.f32.mrb[0].mxu0
    %v2256 = vpop.f32.mrb[0].mxu0
    %2257 = vdwg.mxu0
    %2258 = vmatprep.subr.bf16.mxu0 %v1711
    %2259 = vmatpush1.bf16.msra.mxu0 %v1710
    %2260 = vmatprep.subr.bf16.mxu0 %v1715
    %2261 = vmatpush1.bf16.msra.mxu0 %v1714
    %2262 = vmatprep.subr.bf16.mxu0 %v1719
    %2263 = vmatpush1.bf16.msra.mxu0 %v1718
    %2264 = vmatprep.subr.bf16.mxu0 %v1723
    %2265 = vmatpush1.bf16.msra.mxu0 %v1722
    %2266 = vmatprep.subr.bf16.mxu0 %v1727
    %2267 = vmatpush1.bf16.msra.mxu0 %v1726
    %2268 = vmatprep.subr.bf16.mxu0 %v1731
    %2269 = vmatpush1.bf16.msra.mxu0 %v1730
    %2270 = vmatprep.subr.bf16.mxu0 %v1735
    %2271 = vmatpush1.bf16.msra.mxu0 %v1734
    %2272 = vmatprep.subr.bf16.mxu0 %v1739
    %2273 = vmatpush1.bf16.msra.mxu0 %v1738
    %2274 = vmatprep.subr.bf16.mxu0 %v1743
    %2275 = vmatpush1.bf16.msra.mxu0 %v1742
    %2276 = vmatprep.subr.bf16.mxu0 %v1747
    %2277 = vmatpush1.bf16.msra.mxu0 %v1746
    %2278 = vmatprep.subr.bf16.mxu0 %v1751
    %2279 = vmatpush1.bf16.msra.mxu0 %v1750
    %2280 = vmatprep.subr.bf16.mxu0 %v1755
    %2281 = vmatpush1.bf16.msra.mxu0 %v1754
    %2282 = vmatprep.subr.bf16.mxu0 %v1759
    %2283 = vmatpush1.bf16.msra.mxu0 %v1758
    %2284 = vmatprep.subr.bf16.mxu0 %v1763
    %2285 = vmatpush1.bf16.msra.mxu0 %v1762
    %2286 = vmatprep.subr.bf16.mxu0 %v1767
    %2287 = vmatpush1.bf16.msra.mxu0 %v1766
    %2288 = vmatprep.subr.bf16.mxu0 %v1771
    %2289 = vmatpush1.bf16.msra.mxu0 %v1770
    %2290 = vmatprep.mubr.bf16.mxu0 %v173
    %2291 = vmatmul.mubr.bf16.gmra.mrb[0].mxu0 %v172
    %v2292 = vpop.f32.mrb[0].mxu0
    %v2293 = vadd.f32 %v2252, %v2292
    %v2294 = vpop.f32.mrb[0].mxu0
    %v2295 = vadd.f32 %v2254, %v2294
    %v2296 = vpop.f32.mrb[0].mxu0
    %v2297 = vpop.f32.mrb[0].mxu0
    %2298 = vdwg.mxu0
    %2299 = vmatprep.subr.bf16.mxu0 %v1457
    %2300 = vmatpush1.bf16.msra.mxu0 %v1456
    %2301 = vmatprep.subr.bf16.mxu0 %v1461
    %2302 = vmatpush1.bf16.msra.mxu0 %v1460
    %2303 = vmatprep.subr.bf16.mxu0 %v1465
    %2304 = vmatpush1.bf16.msra.mxu0 %v1464
    %2305 = vmatprep.subr.bf16.mxu0 %v1469
    %2306 = vmatpush1.bf16.msra.mxu0 %v1468
    %2307 = vmatprep.subr.bf16.mxu0 %v1473
    %2308 = vmatpush1.bf16.msra.mxu0 %v1472
    %2309 = vmatprep.subr.bf16.mxu0 %v1477
    %2310 = vmatpush1.bf16.msra.mxu0 %v1476
    %2311 = vmatprep.subr.bf16.mxu0 %v1481
    %2312 = vmatpush1.bf16.msra.mxu0 %v1480
    %2313 = vmatprep.subr.bf16.mxu0 %v1485
    %2314 = vmatpush1.bf16.msra.mxu0 %v1484
    %2315 = vmatprep.subr.bf16.mxu0 %v1489
    %2316 = vmatpush1.bf16.msra.mxu0 %v1488
    %2317 = vmatprep.subr.bf16.mxu0 %v1493
    %2318 = vmatpush1.bf16.msra.mxu0 %v1492
    %2319 = vmatprep.subr.bf16.mxu0 %v1497
    %2320 = vmatpush1.bf16.msra.mxu0 %v1496
    %2321 = vmatprep.subr.bf16.mxu0 %v1501
    %2322 = vmatpush1.bf16.msra.mxu0 %v1500
    %2323 = vmatprep.subr.bf16.mxu0 %v1505
    %2324 = vmatpush1.bf16.msra.mxu0 %v1504
    %2325 = vmatprep.subr.bf16.mxu0 %v1509
    %2326 = vmatpush1.bf16.msra.mxu0 %v1508
    %2327 = vmatprep.subr.bf16.mxu0 %v1513
    %2328 = vmatpush1.bf16.msra.mxu0 %v1512
    %2329 = vmatprep.subr.bf16.mxu0 %v1517
    %2330 = vmatpush1.bf16.msra.mxu0 %v1516
    %2331 = vmatprep.mubr.bf16.mxu0 %v165
    %2332 = vmatmul.mubr.bf16.gmra.mrb[0].mxu0 %v164
    %v2333 = vpop.f32.mrb[0].mxu0
    %v2334 = vadd.f32 0.0, %v2333
    %v2335 = vpop.f32.mrb[0].mxu0
    %v2336 = vadd.f32 0.0, %v2335
    %v2337 = vpop.f32.mrb[0].mxu0
    %v2338 = vpop.f32.mrb[0].mxu0
    %2339 = vdwg.mxu0
    %2340 = vmatprep.subr.bf16.mxu0 %v1521
    %2341 = vmatpush1.bf16.msra.mxu0 %v1520
    %2342 = vmatprep.subr.bf16.mxu0 %v1525
    %2343 = vmatpush1.bf16.msra.mxu0 %v1524
    %2344 = vmatprep.subr.bf16.mxu0 %v1529
    %2345 = vmatpush1.bf16.msra.mxu0 %v1528
    %2346 = vmatprep.subr.bf16.mxu0 %v1533
    %2347 = vmatpush1.bf16.msra.mxu0 %v1532
    %2348 = vmatprep.subr.bf16.mxu0 %v1537
    %2349 = vmatpush1.bf16.msra.mxu0 %v1536
    %2350 = vmatprep.subr.bf16.mxu0 %v1541
    %2351 = vmatpush1.bf16.msra.mxu0 %v1540
    %2352 = vmatprep.subr.bf16.mxu0 %v1545
    %2353 = vmatpush1.bf16.msra.mxu0 %v1544
    %2354 = vmatprep.subr.bf16.mxu0 %v1549
    %2355 = vmatpush1.bf16.msra.mxu0 %v1548
    %2356 = vmatprep.subr.bf16.mxu0 %v1553
    %2357 = vmatpush1.bf16.msra.mxu0 %v1552
    %2358 = vmatprep.subr.bf16.mxu0 %v1557
    %2359 = vmatpush1.bf16.msra.mxu0 %v1556
    %2360 = vmatprep.subr.bf16.mxu0 %v1561
    %2361 = vmatpush1.bf16.msra.mxu0 %v1560
    %2362 = vmatprep.subr.bf16.mxu0 %v1565
    %2363 = vmatpush1.bf16.msra.mxu0 %v1564
    %2364 = vmatprep.subr.bf16.mxu0 %v1569
    %2365 = vmatpush1.bf16.msra.mxu0 %v1568
    %2366 = vmatprep.subr.bf16.mxu0 %v1573
    %2367 = vmatpush1.bf16.msra.mxu0 %v1572
    %2368 = vmatprep.subr.bf16.mxu0 %v1577
    %2369 = vmatpush1.bf16.msra.mxu0 %v1576
    %2370 = vmatprep.subr.bf16.mxu0 %v1581
    %2371 = vmatpush1.bf16.msra.mxu0 %v1580
    %2372 = vmatprep.mubr.bf16.mxu0 %v167
    %2373 = vmatmul.mubr.bf16.gmra.mrb[0].mxu0 %v166
    %v2374 = vpop.f32.mrb[0].mxu0
    %v2375 = vadd.f32 %v2334, %v2374
    %v2376 = vpop.f32.mrb[0].mxu0
    %v2377 = vadd.f32 %v2336, %v2376
    %v2378 = vpop.f32.mrb[0].mxu0
    %v2379 = vpop.f32.mrb[0].mxu0
    %2380 = vdwg.mxu0
    %2381 = vmatprep.subr.bf16.mxu0 %v1585
    %2382 = vmatpush1.bf16.msra.mxu0 %v1584
    %2383 = vmatprep.subr.bf16.mxu0 %v1589
    %2384 = vmatpush1.bf16.msra.mxu0 %v1588
    %2385 = vmatprep.subr.bf16.mxu0 %v1593
    %2386 = vmatpush1.bf16.msra.mxu0 %v1592
    %2387 = vmatprep.subr.bf16.mxu0 %v1597
    %2388 = vmatpush1.bf16.msra.mxu0 %v1596
    %2389 = vmatprep.subr.bf16.mxu0 %v1601
    %2390 = vmatpush1.bf16.msra.mxu0 %v1600
    %2391 = vmatprep.subr.bf16.mxu0 %v1605
    %2392 = vmatpush1.bf16.msra.mxu0 %v1604
    %2393 = vmatprep.subr.bf16.mxu0 %v1609
    %2394 = vmatpush1.bf16.msra.mxu0 %v1608
    %2395 = vmatprep.subr.bf16.mxu0 %v1613
    %2396 = vmatpush1.bf16.msra.mxu0 %v1612
    %2397 = vmatprep.subr.bf16.mxu0 %v1617
    %2398 = vmatpush1.bf16.msra.mxu0 %v1616
    %2399 = vmatprep.subr.bf16.mxu0 %v1621
    %2400 = vmatpush1.bf16.msra.mxu0 %v1620
    %2401 = vmatprep.subr.bf16.mxu0 %v1625
    %2402 = vmatpush1.bf16.msra.mxu0 %v1624
    %2403 = vmatprep.subr.bf16.mxu0 %v1629
    %2404 = vmatpush1.bf16.msra.mxu0 %v1628
    %2405 = vmatprep.subr.bf16.mxu0 %v1633
    %2406 = vmatpush1.bf16.msra.mxu0 %v1632
    %2407 = vmatprep.subr.bf16.mxu0 %v1637
    %2408 = vmatpush1.bf16.msra.mxu0 %v1636
    %2409 = vmatprep.subr.bf16.mxu0 %v1641
    %2410 = vmatpush1.bf16.msra.mxu0 %v1640
    %2411 = vmatprep.subr.bf16.mxu0 %v1645
    %2412 = vmatpush1.bf16.msra.mxu0 %v1644
    %2413 = vmatprep.mubr.bf16.mxu0 %v169
    %2414 = vmatmul.mubr.bf16.gmra.mrb[0].mxu0 %v168
    %v2415 = vpop.f32.mrb[0].mxu0
    %v2416 = vadd.f32 %v2375, %v2415
    %v2417 = vpop.f32.mrb[0].mxu0
    %v2418 = vadd.f32 %v2377, %v2417
    %v2419 = vpop.f32.mrb[0].mxu0
    %v2420 = vpop.f32.mrb[0].mxu0
    %2421 = vdwg.mxu0
    %2422 = vmatprep.subr.bf16.mxu0 %v1649
    %2423 = vmatpush1.bf16.msra.mxu0 %v1648
    %2424 = vmatprep.subr.bf16.mxu0 %v1653
    %2425 = vmatpush1.bf16.msra.mxu0 %v1652
    %2426 = vmatprep.subr.bf16.mxu0 %v1657
    %2427 = vmatpush1.bf16.msra.mxu0 %v1656
    %2428 = vmatprep.subr.bf16.mxu0 %v1661
    %2429 = vmatpush1.bf16.msra.mxu0 %v1660
    %2430 = vmatprep.subr.bf16.mxu0 %v1665
    %2431 = vmatpush1.bf16.msra.mxu0 %v1664
    %2432 = vmatprep.subr.bf16.mxu0 %v1669
    %2433 = vmatpush1.bf16.msra.mxu0 %v1668
    %2434 = vmatprep.subr.bf16.mxu0 %v1673
    %2435 = vmatpush1.bf16.msra.mxu0 %v1672
    %2436 = vmatprep.subr.bf16.mxu0 %v1677
    %2437 = vmatpush1.bf16.msra.mxu0 %v1676
    %2438 = vmatprep.subr.bf16.mxu0 %v1681
    %2439 = vmatpush1.bf16.msra.mxu0 %v1680
    %2440 = vmatprep.subr.bf16.mxu0 %v1685
    %2441 = vmatpush1.bf16.msra.mxu0 %v1684
    %2442 = vmatprep.subr.bf16.mxu0 %v1689
    %2443 = vmatpush1.bf16.msra.mxu0 %v1688
    %2444 = vmatprep.subr.bf16.mxu0 %v1693
    %2445 = vmatpush1.bf16.msra.mxu0 %v1692
    %2446 = vmatprep.subr.bf16.mxu0 %v1697
    %2447 = vmatpush1.bf16.msra.mxu0 %v1696
    %2448 = vmatprep.subr.bf16.mxu0 %v1701
    %2449 = vmatpush1.bf16.msra.mxu0 %v1700
    %2450 = vmatprep.subr.bf16.mxu0 %v1705
    %2451 = vmatpush1.bf16.msra.mxu0 %v1704
    %2452 = vmatprep.subr.bf16.mxu0 %v1709
    %2453 = vmatpush1.bf16.msra.mxu0 %v1708
    %2454 = vmatprep.mubr.bf16.mxu0 %v171
    %2455 = vmatmul.mubr.bf16.gmra.mrb[0].mxu0 %v170
    %v2456 = vpop.f32.mrb[0].mxu0
    %v2457 = vadd.f32 %v2416, %v2456
    %v2458 = vpop.f32.mrb[0].mxu0
    %v2459 = vadd.f32 %v2418, %v2458
    %v2460 = vpop.f32.mrb[0].mxu0
    %v2461 = vpop.f32.mrb[0].mxu0
    %2462 = vdwg.mxu0
    %2463 = vmatprep.subr.bf16.mxu0 %v1713
    %2464 = vmatpush1.bf16.msra.mxu0 %v1712
    %2465 = vmatprep.subr.bf16.mxu0 %v1717
    %2466 = vmatpush1.bf16.msra.mxu0 %v1716
    %2467 = vmatprep.subr.bf16.mxu0 %v1721
    %2468 = vmatpush1.bf16.msra.mxu0 %v1720
    %2469 = vmatprep.subr.bf16.mxu0 %v1725
    %2470 = vmatpush1.bf16.msra.mxu0 %v1724
    %2471 = vmatprep.subr.bf16.mxu0 %v1729
    %2472 = vmatpush1.bf16.msra.mxu0 %v1728
    %2473 = vmatprep.subr.bf16.mxu0 %v1733
    %2474 = vmatpush1.bf16.msra.mxu0 %v1732
    %2475 = vmatprep.subr.bf16.mxu0 %v1737
    %2476 = vmatpush1.bf16.msra.mxu0 %v1736
    %2477 = vmatprep.subr.bf16.mxu0 %v1741
    %2478 = vmatpush1.bf16.msra.mxu0 %v1740
    %2479 = vmatprep.subr.bf16.mxu0 %v1745
    %2480 = vmatpush1.bf16.msra.mxu0 %v1744
    %2481 = vmatprep.subr.bf16.mxu0 %v1749
    %2482 = vmatpush1.bf16.msra.mxu0 %v1748
    %2483 = vmatprep.subr.bf16.mxu0 %v1753
    %2484 = vmatpush1.bf16.msra.mxu0 %v1752
    %2485 = vmatprep.subr.bf16.mxu0 %v1757
    %2486 = vmatpush1.bf16.msra.mxu0 %v1756
    %2487 = vmatprep.subr.bf16.mxu0 %v1761
    %2488 = vmatpush1.bf16.msra.mxu0 %v1760
    %2489 = vmatprep.subr.bf16.mxu0 %v1765
    %2490 = vmatpush1.bf16.msra.mxu0 %v1764
    %2491 = vmatprep.subr.bf16.mxu0 %v1769
    %2492 = vmatpush1.bf16.msra.mxu0 %v1768
    %2493 = vmatprep.subr.bf16.mxu0 %v1773
    %2494 = vmatpush1.bf16.msra.mxu0 %v1772
    %2495 = vmatprep.mubr.bf16.mxu0 %v173
    %2496 = vmatmul.mubr.bf16.gmra.mrb[0].mxu0 %v172
    %v2497 = vpop.f32.mrb[0].mxu0
    %v2498 = vadd.f32 %v2457, %v2497
    %v2499 = vpop.f32.mrb[0].mxu0
    %v2500 = vadd.f32 %v2459, %v2499
    %v2501 = vpop.f32.mrb[0].mxu0
    %v2502 = vpop.f32.mrb[0].mxu0
    %2503 = vdwg.mxu0
    %v2504 = vld [vmem:[#allocation3] sm:$0xf]
    %v2505 = vrot.slane %v2293, 4
    %v2506 = vadd.f32 %v2293, %v2505
    %v2507 = vrot.slane %v2506, 2
    %v2508 = vadd.f32 %v2506, %v2507
    %v2509 = vrot.slane %v2508, 1
    %v2510 = vadd.f32 %v2508, %v2509
    %v2511 = vrot.slane %v2295, 4
    %v2512 = vadd.f32 %v2295, %v2511
    %v2513 = vrot.slane %v2512, 2
    %v2514 = vadd.f32 %v2512, %v2513
    %v2515 = vrot.slane %v2514, 1
    %v2516 = vadd.f32 %v2514, %v2515
    %v2517 = vrot.slane %v2498, 4
    %v2518 = vadd.f32 %v2498, %v2517
    %v2519 = vrot.slane %v2518, 2
    %v2520 = vadd.f32 %v2518, %v2519
    %v2521 = vrot.slane %v2520, 1
    %v2522 = vadd.f32 %v2520, %v2521
    %v2523 = vrot.slane %v2500, 4
    %v2524 = vadd.f32 %v2500, %v2523
    %v2525 = vrot.slane %v2524, 2
    %v2526 = vadd.f32 %v2524, %v2525
    %v2527 = vrot.slane %v2526, 1
    %v2528 = vadd.f32 %v2526, %v2527
    %v2533 = vcombine.low %v2510, %v2516
    %v2534 = vcombine.low %v2522, %v2528
    %v2536 = vunpack.c.l.s4 1966171168
    %v2537 = vunpack.c.0.s8 %v2536
    %v2538 = vlaneseq
    %v2539 = vshrl.u32 %v2538, 7
    %v2540 = vsub.s32 %v2537, %v2539
    %v2541 = vrot.slane %v2533, %v2540
    %v2543 = vunpack.c.l.s4 1966171168
    %v2544 = vunpack.c.0.s8 %v2543
    %v2545 = vlaneseq
    %v2546 = vshrl.u32 %v2545, 7
    %v2547 = vsub.s32 %v2544, %v2546
    %v2548 = vrot.slane %v2534, %v2547
    %v2549 = vcombine.low %v2541, %v2548
    %v2551 = vunpack.c.l.s4 1966171168
    %v2552 = vunpack.c.0.s8 %v2551
    %v2553 = vlaneseq
    %v2554 = vshrl.u32 %v2553, 7
    %v2555 = vsub.s32 %v2552, %v2554
    %v2556 = vrot.slane %v2549, %v2555
    %v2558 = vadd.f32 %v2504, %v2556
    %v2559 = vlaneseq
    %vm2560 = vcmp.ge.s32.totalorder %v2559, 0
    %vm2561 = vcmp.lt.s32.totalorder %v2559, 512
    %vm2562 = vmand %vm2560, %vm2561
    %2563 = vst.msk [vmem:[#allocation3] sm:$0xf] %vm2562, %v2558
    %v2564 = vld [vmem:[#allocation4] sm:$0xf]
    %v2565 = vmul.f32 %v2293, %v2293
    %v2566 = vmul.f32 %v2295, %v2295
    %v2567 = vmul.f32 %v2498, %v2498
    %v2568 = vmul.f32 %v2500, %v2500
    %v2569 = vrot.slane %v2565, 4
    %v2570 = vadd.f32 %v2565, %v2569
    %v2571 = vrot.slane %v2570, 2
    %v2572 = vadd.f32 %v2570, %v2571
    %v2573 = vrot.slane %v2572, 1
    %v2574 = vadd.f32 %v2572, %v2573
    %v2575 = vrot.slane %v2566, 4
    %v2576 = vadd.f32 %v2566, %v2575
    %v2577 = vrot.slane %v2576, 2
    %v2578 = vadd.f32 %v2576, %v2577
    %v2579 = vrot.slane %v2578, 1
    %v2580 = vadd.f32 %v2578, %v2579
    %v2581 = vrot.slane %v2567, 4
    %v2582 = vadd.f32 %v2567, %v2581
    %v2583 = vrot.slane %v2582, 2
    %v2584 = vadd.f32 %v2582, %v2583
    %v2585 = vrot.slane %v2584, 1
    %v2586 = vadd.f32 %v2584, %v2585
    %v2587 = vrot.slane %v2568, 4
    %v2588 = vadd.f32 %v2568, %v2587
    %v2589 = vrot.slane %v2588, 2
    %v2590 = vadd.f32 %v2588, %v2589
    %v2591 = vrot.slane %v2590, 1
    %v2592 = vadd.f32 %v2590, %v2591
    %v2597 = vcombine.low %v2574, %v2580
    %v2598 = vcombine.low %v2586, %v2592
    %v2600 = vunpack.c.l.s4 1966171168
    %v2601 = vunpack.c.0.s8 %v2600
    %v2602 = vlaneseq
    %v2603 = vshrl.u32 %v2602, 7
    %v2604 = vsub.s32 %v2601, %v2603
    %v2605 = vrot.slane %v2597, %v2604
    %v2607 = vunpack.c.l.s4 1966171168
    %v2608 = vunpack.c.0.s8 %v2607
    %v2609 = vlaneseq
    %v2610 = vshrl.u32 %v2609, 7
    %v2611 = vsub.s32 %v2608, %v2610
    %v2612 = vrot.slane %v2598, %v2611
    %v2613 = vcombine.low %v2605, %v2612
    %v2615 = vunpack.c.l.s4 1966171168
    %v2616 = vunpack.c.0.s8 %v2615
    %v2617 = vlaneseq
    %v2618 = vshrl.u32 %v2617, 7
    %v2619 = vsub.s32 %v2616, %v2618
    %v2620 = vrot.slane %v2613, %v2619
    %v2622 = vadd.f32 %v2564, %v2620
    %2623 = vst.msk [vmem:[#allocation4] sm:$0xf] %vm2562, %v2622
    %s2624 = smul.u32 0, 8
    %s2625 = sshra.s32 %s2624, 3
    %s2626 = sand.u32 %s2624, 7
    %s2627 = smul.u32 %s2625, 4
    %s2628 = smul.addr %s2627, 8
    %s2629 = scalar_lea.vmem [#allocation2], %s2628
    %2630 = vst [vmem:[%s2629] sm:$0xff] %v2293
    %2631 = vst [vmem:[%s2629 + $0x8] sm:$0xff] %v2295
    %2632 = vst [vmem:[%s2629 + $0x10] sm:$0xff] %v2498
    %2633 = vst [vmem:[%s2629 + $0x18] sm:$0xff] %v2500
    // Predicated region
    $region78: #{tpu_custom_call.1} parent=1 // pred_check
      %p2634 = pneg %p144
    $region79: #{tpu_custom_call.1} parent=1 // pred_check_branch
      %2636 = sbr.rel (%p2634) target = $region81
    $region80: #{tpu_custom_call.1} parent=1 // pred_region
      %v2637 = vld [vmem:[#allocation3] sm:$0xf]
      %v2638 = vmul.f32 %v2637, 0.125
      %v2639 = vld [vmem:[#allocation4] sm:$0xf]
      %v2640 = vmul.f32 %v2639, 0.125
      %v2641 = vmul.f32 %v2638, %v2638
      %v2642 = vsub.f32 %v2640, %v2641
      %v2643 = vmax.f32 %v2642, 0.0
      %v2644 = vld [vmem:[#allocation10] sm:$0xf]
      %v2645 = vadd.f32 %v2643, 1e-05
      %v2646 = vrsqrt.pop %v2645
      %v2647 = vmul.f32 %v2644, %v2646
      %v2648 = vld [vmem:[#allocation11] sm:$0xf]
      %v2649 = vmul.f32 %v2638, %v2647
      %v2650 = vsub.f32 %v2648, %v2649
      %v2651 = vld [vmem:[#allocation2] sm:$0xff]
      %v2652 = vld [vmem:[#allocation2 + $0x8] sm:$0xff]
      %v2653 = vld [vmem:[#allocation2 + $0x10] sm:$0xff]
      %v2654 = vld [vmem:[#allocation2 + $0x18] sm:$0xff]
      %v2656 = vlaneseq
      %v2657 = vshrl.u32 %v2656, 7
      %v2658 = vsub.s32 0, %v2657
      %v2659 = vrot.slane %v2647, %v2658
      %v2660 = vlaneseq
      %v2661 = vshrl.u32 %v2660, 7
      %v2662 = vsub.s32 1, %v2661
      %v2663 = vrot.slane %v2647, %v2662
      %v2664 = vlaneseq
      %v2665 = vshrl.u32 %v2664, 7
      %v2666 = vsub.s32 2, %v2665
      %v2667 = vrot.slane %v2647, %v2666
      %v2668 = vlaneseq
      %v2669 = vshrl.u32 %v2668, 7
      %v2670 = vsub.s32 3, %v2669
      %v2671 = vrot.slane %v2647, %v2670
      %v2676 = vmul.f32 %v2651, %v2659
      %v2677 = vmul.f32 %v2652, %v2663
      %v2678 = vmul.f32 %v2653, %v2667
      %v2679 = vmul.f32 %v2654, %v2671
      %v2681 = vlaneseq
      %v2682 = vshrl.u32 %v2681, 7
      %v2683 = vsub.s32 0, %v2682
      %v2684 = vrot.slane %v2650, %v2683
      %v2685 = vlaneseq
      %v2686 = vshrl.u32 %v2685, 7
      %v2687 = vsub.s32 1, %v2686
      %v2688 = vrot.slane %v2650, %v2687
      %v2689 = vlaneseq
      %v2690 = vshrl.u32 %v2689, 7
      %v2691 = vsub.s32 2, %v2690
      %v2692 = vrot.slane %v2650, %v2691
      %v2693 = vlaneseq
      %v2694 = vshrl.u32 %v2693, 7
      %v2695 = vsub.s32 3, %v2694
      %v2696 = vrot.slane %v2650, %v2695
      %v2701 = vadd.f32 %v2676, %v2684
      %v2702 = vadd.f32 %v2677, %v2688
      %v2703 = vadd.f32 %v2678, %v2692
      %v2704 = vadd.f32 %v2679, %v2696
      %v2705 = vmax.f32 %v2701, 0.0
      %v2706 = vmax.f32 %v2702, 0.0
      %v2707 = vmax.f32 %v2703, 0.0
      %v2708 = vmax.f32 %v2704, 0.0
      %v2709 = vpack.c.bf16 %v2705, %v2705
      %v2710 = vpack.c.bf16 %v2706, %v2706
      %v2711 = vpack.c.bf16 %v2707, %v2707
      %v2712 = vpack.c.bf16 %v2708, %v2708
      %v2713 = vld [vmem:[#allocation13] sm:$0xf]
      %v2714 = vld [vmem:[#allocation13 + $0x4] sm:$0xf]
      %v2715 = vld [vmem:[#allocation13 + $0x8] sm:$0xf]
      %v2716 = vld [vmem:[#allocation13 + $0xc] sm:$0xf]
      %v2717 = vld [vmem:[#allocation13 + $0x10] sm:$0xf]
      %v2718 = vld [vmem:[#allocation13 + $0x14] sm:$0xf]
      %v2719 = vld [vmem:[#allocation13 + $0x18] sm:$0xf]
      %v2720 = vld [vmem:[#allocation13 + $0x1c] sm:$0xf]
      %v2721 = vld [vmem:[#allocation13 + $0x20] sm:$0xf]
      %v2722 = vld [vmem:[#allocation13 + $0x24] sm:$0xf]
      %v2723 = vld [vmem:[#allocation13 + $0x28] sm:$0xf]
      %v2724 = vld [vmem:[#allocation13 + $0x2c] sm:$0xf]
      %v2725 = vld [vmem:[#allocation13 + $0x30] sm:$0xf]
      %v2726 = vld [vmem:[#allocation13 + $0x34] sm:$0xf]
      %v2727 = vld [vmem:[#allocation13 + $0x38] sm:$0xf]
      %v2728 = vld [vmem:[#allocation13 + $0x3c] sm:$0xf]
      %v2729 = vld [vmem:[#allocation13 + $0x40] sm:$0xf]
      %v2730 = vld [vmem:[#allocation13 + $0x44] sm:$0xf]
      %v2731 = vld [vmem:[#allocation13 + $0x48] sm:$0xf]
      %v2732 = vld [vmem:[#allocation13 + $0x4c] sm:$0xf]
      %v2733 = vld [vmem:[#allocation13 + $0x50] sm:$0xf]
      %v2734 = vld [vmem:[#allocation13 + $0x54] sm:$0xf]
      %v2735 = vld [vmem:[#allocation13 + $0x58] sm:$0xf]
      %v2736 = vld [vmem:[#allocation13 + $0x5c] sm:$0xf]
      %v2737 = vld [vmem:[#allocation13 + $0x60] sm:$0xf]
      %v2738 = vld [vmem:[#allocation13 + $0x64] sm:$0xf]
      %v2739 = vld [vmem:[#allocation13 + $0x68] sm:$0xf]
      %v2740 = vld [vmem:[#allocation13 + $0x6c] sm:$0xf]
      %v2741 = vld [vmem:[#allocation13 + $0x70] sm:$0xf]
      %v2742 = vld [vmem:[#allocation13 + $0x74] sm:$0xf]
      %v2743 = vld [vmem:[#allocation13 + $0x78] sm:$0xf]
      %v2744 = vld [vmem:[#allocation13 + $0x7c] sm:$0xf]
      %v2745 = vld [vmem:[#allocation13 + $0x80] sm:$0xf]
      %v2746 = vld [vmem:[#allocation13 + $0x84] sm:$0xf]
      %v2747 = vld [vmem:[#allocation13 + $0x88] sm:$0xf]
      %v2748 = vld [vmem:[#allocation13 + $0x8c] sm:$0xf]
      %v2749 = vld [vmem:[#allocation13 + $0x90] sm:$0xf]
      %v2750 = vld [vmem:[#allocation13 + $0x94] sm:$0xf]
      %v2751 = vld [vmem:[#allocation13 + $0x98] sm:$0xf]
      %v2752 = vld [vmem:[#allocation13 + $0x9c] sm:$0xf]
      %v2753 = vld [vmem:[#allocation13 + $0xa0] sm:$0xf]
      %v2754 = vld [vmem:[#allocation13 + $0xa4] sm:$0xf]
      %v2755 = vld [vmem:[#allocation13 + $0xa8] sm:$0xf]
      %v2756 = vld [vmem:[#allocation13 + $0xac] sm:$0xf]
      %v2757 = vld [vmem:[#allocation13 + $0xb0] sm:$0xf]
      %v2758 = vld [vmem:[#allocation13 + $0xb4] sm:$0xf]
      %v2759 = vld [vmem:[#allocation13 + $0xb8] sm:$0xf]
      %v2760 = vld [vmem:[#allocation13 + $0xbc] sm:$0xf]
      %v2761 = vld [vmem:[#allocation13 + $0xc0] sm:$0xf]
      %v2762 = vld [vmem:[#allocation13 + $0xc4] sm:$0xf]
      %v2763 = vld [vmem:[#allocation13 + $0xc8] sm:$0xf]
      %v2764 = vld [vmem:[#allocation13 + $0xcc] sm:$0xf]
      %v2765 = vld [vmem:[#allocation13 + $0xd0] sm:$0xf]
      %v2766 = vld [vmem:[#allocation13 + $0xd4] sm:$0xf]
      %v2767 = vld [vmem:[#allocation13 + $0xd8] sm:$0xf]
      %v2768 = vld [vmem:[#allocation13 + $0xdc] sm:$0xf]
      %v2769 = vld [vmem:[#allocation13 + $0xe0] sm:$0xf]
      %v2770 = vld [vmem:[#allocation13 + $0xe4] sm:$0xf]
      %v2771 = vld [vmem:[#allocation13 + $0xe8] sm:$0xf]
      %v2772 = vld [vmem:[#allocation13 + $0xec] sm:$0xf]
      %v2773 = vld [vmem:[#allocation13 + $0xf0] sm:$0xf]
      %v2774 = vld [vmem:[#allocation13 + $0xf4] sm:$0xf]
      %v2775 = vld [vmem:[#allocation13 + $0xf8] sm:$0xf]
      %v2776 = vld [vmem:[#allocation13 + $0xfc] sm:$0xf]
      %v2841 = vunpack.c.l.b16 %v2713
      %v2842 = vunpack.c.l.b16 %v2714
      %v2843 = vunpack.c.l.b16 %v2715
      %v2844 = vunpack.c.l.b16 %v2716
      %v2845 = vunpack.c.l.b16 %v2717
      %v2846 = vunpack.c.l.b16 %v2718
      %v2847 = vunpack.c.l.b16 %v2719
      %v2848 = vunpack.c.l.b16 %v2720
      %v2849 = vunpack.c.l.b16 %v2721
      %v2850 = vunpack.c.l.b16 %v2722
      %v2851 = vunpack.c.l.b16 %v2723
      %v2852 = vunpack.c.l.b16 %v2724
      %v2853 = vunpack.c.l.b16 %v2725
      %v2854 = vunpack.c.l.b16 %v2726
      %v2855 = vunpack.c.l.b16 %v2727
      %v2856 = vunpack.c.l.b16 %v2728
      %v2857 = vunpack.c.l.b16 %v2729
      %v2858 = vunpack.c.l.b16 %v2730
      %v2859 = vunpack.c.l.b16 %v2731
      %v2860 = vunpack.c.l.b16 %v2732
      %v2861 = vunpack.c.l.b16 %v2733
      %v2862 = vunpack.c.l.b16 %v2734
      %v2863 = vunpack.c.l.b16 %v2735
      %v2864 = vunpack.c.l.b16 %v2736
      %v2865 = vunpack.c.l.b16 %v2737
      %v2866 = vunpack.c.l.b16 %v2738
      %v2867 = vunpack.c.l.b16 %v2739
      %v2868 = vunpack.c.l.b16 %v2740
      %v2869 = vunpack.c.l.b16 %v2741
      %v2870 = vunpack.c.l.b16 %v2742
      %v2871 = vunpack.c.l.b16 %v2743
      %v2872 = vunpack.c.l.b16 %v2744
      %v2873 = vunpack.c.l.b16 %v2745
      %v2874 = vunpack.c.l.b16 %v2746
      %v2875 = vunpack.c.l.b16 %v2747
      %v2876 = vunpack.c.l.b16 %v2748
      %v2877 = vunpack.c.l.b16 %v2749
      %v2878 = vunpack.c.l.b16 %v2750
      %v2879 = vunpack.c.l.b16 %v2751
      %v2880 = vunpack.c.l.b16 %v2752
      %v2881 = vunpack.c.l.b16 %v2753
      %v2882 = vunpack.c.l.b16 %v2754
      %v2883 = vunpack.c.l.b16 %v2755
      %v2884 = vunpack.c.l.b16 %v2756
      %v2885 = vunpack.c.l.b16 %v2757
      %v2886 = vunpack.c.l.b16 %v2758
      %v2887 = vunpack.c.l.b16 %v2759
      %v2888 = vunpack.c.l.b16 %v2760
      %v2889 = vunpack.c.l.b16 %v2761
      %v2890 = vunpack.c.l.b16 %v2762
      %v2891 = vunpack.c.l.b16 %v2763
      %v2892 = vunpack.c.l.b16 %v2764
      %v2893 = vunpack.c.l.b16 %v2765
      %v2894 = vunpack.c.l.b16 %v2766
      %v2895 = vunpack.c.l.b16 %v2767
      %v2896 = vunpack.c.l.b16 %v2768
      %v2897 = vunpack.c.l.b16 %v2769
      %v2898 = vunpack.c.l.b16 %v2770
      %v2899 = vunpack.c.l.b16 %v2771
      %v2900 = vunpack.c.l.b16 %v2772
      %v2901 = vunpack.c.l.b16 %v2773
      %v2902 = vunpack.c.l.b16 %v2774
      %v2903 = vunpack.c.l.b16 %v2775
      %v2904 = vunpack.c.l.b16 %v2776
      %v2905 = vpack.c.b16 %v2842, %v2841
      %v2906 = vpack.c.b16 %v2844, %v2843
      %v2907 = vpack.c.b16 %v2846, %v2845
      %v2908 = vpack.c.b16 %v2848, %v2847
      %v2909 = vpack.c.b16 %v2850, %v2849
      %v2910 = vpack.c.b16 %v2852, %v2851
      %v2911 = vpack.c.b16 %v2854, %v2853
      %v2912 = vpack.c.b16 %v2856, %v2855
      %v2913 = vpack.c.b16 %v2858, %v2857
      %v2914 = vpack.c.b16 %v2860, %v2859
      %v2915 = vpack.c.b16 %v2862, %v2861
      %v2916 = vpack.c.b16 %v2864, %v2863
      %v2917 = vpack.c.b16 %v2866, %v2865
      %v2918 = vpack.c.b16 %v2868, %v2867
      %v2919 = vpack.c.b16 %v2870, %v2869
      %v2920 = vpack.c.b16 %v2872, %v2871
      %v2921 = vpack.c.b16 %v2874, %v2873
      %v2922 = vpack.c.b16 %v2876, %v2875
      %v2923 = vpack.c.b16 %v2878, %v2877
      %v2924 = vpack.c.b16 %v2880, %v2879
      %v2925 = vpack.c.b16 %v2882, %v2881
      %v2926 = vpack.c.b16 %v2884, %v2883
      %v2927 = vpack.c.b16 %v2886, %v2885
      %v2928 = vpack.c.b16 %v2888, %v2887
      %v2929 = vpack.c.b16 %v2890, %v2889
      %v2930 = vpack.c.b16 %v2892, %v2891
      %v2931 = vpack.c.b16 %v2894, %v2893
      %v2932 = vpack.c.b16 %v2896, %v2895
      %v2933 = vpack.c.b16 %v2898, %v2897
      %v2934 = vpack.c.b16 %v2900, %v2899
      %v2935 = vpack.c.b16 %v2902, %v2901
      %v2936 = vpack.c.b16 %v2904, %v2903
      %2969 = vmatprep.subr.bf16.mxu0 0
      %2970 = vmatpush1.bf16.msra.mxu0 %v2905
      %2971 = vmatprep.subr.bf16.mxu0 0
      %2972 = vmatpush1.bf16.msra.mxu0 %v2906
      %2973 = vmatprep.subr.bf16.mxu0 0
      %2974 = vmatpush1.bf16.msra.mxu0 %v2907
      %2975 = vmatprep.subr.bf16.mxu0 0
      %2976 = vmatpush1.bf16.msra.mxu0 %v2908
      %2977 = vmatprep.subr.bf16.mxu0 0
      %2978 = vmatpush1.bf16.msra.mxu0 %v2909
      %2979 = vmatprep.subr.bf16.mxu0 0
      %2980 = vmatpush1.bf16.msra.mxu0 %v2910
      %2981 = vmatprep.subr.bf16.mxu0 0
      %2982 = vmatpush1.bf16.msra.mxu0 %v2911
      %2983 = vmatprep.subr.bf16.mxu0 0
      %2984 = vmatpush1.bf16.msra.mxu0 %v2912
      %2985 = vmatprep.subr.bf16.mxu0 0
      %2986 = vmatpush1.bf16.msra.mxu0 %v2913
      %2987 = vmatprep.subr.bf16.mxu0 0
      %2988 = vmatpush1.bf16.msra.mxu0 %v2914
      %2989 = vmatprep.subr.bf16.mxu0 0
      %2990 = vmatpush1.bf16.msra.mxu0 %v2915
      %2991 = vmatprep.subr.bf16.mxu0 0
      %2992 = vmatpush1.bf16.msra.mxu0 %v2916
      %2993 = vmatprep.subr.bf16.mxu0 0
      %2994 = vmatpush1.bf16.msra.mxu0 %v2917
      %2995 = vmatprep.subr.bf16.mxu0 0
      %2996 = vmatpush1.bf16.msra.mxu0 %v2918
      %2997 = vmatprep.subr.bf16.mxu0 0
      %2998 = vmatpush1.bf16.msra.mxu0 %v2919
      %2999 = vmatprep.subr.bf16.mxu0 0
      %3000 = vmatpush1.bf16.msra.mxu0 %v2920
      %3001 = vmatprep.mubr.bf16.mxu0 %v2710
      %3002 = vmatmul.mubr.bf16.gmra.mrb[0].mxu0 %v2709
      %v3003 = vpop.f32.mrb[0].mxu0
      %v3004 = vadd.f32 0.0, %v3003
      %v3005 = vpop.f32.mrb[0].mxu0
      %v3006 = vpop.f32.mrb[0].mxu0
      %v3007 = vpop.f32.mrb[0].mxu0
      %3008 = vdwg.mxu0
      %3009 = vmatprep.subr.bf16.mxu0 0
      %3010 = vmatpush1.bf16.msra.mxu0 %v2921
      %3011 = vmatprep.subr.bf16.mxu0 0
      %3012 = vmatpush1.bf16.msra.mxu0 %v2922
      %3013 = vmatprep.subr.bf16.mxu0 0
      %3014 = vmatpush1.bf16.msra.mxu0 %v2923
      %3015 = vmatprep.subr.bf16.mxu0 0
      %3016 = vmatpush1.bf16.msra.mxu0 %v2924
      %3017 = vmatprep.subr.bf16.mxu0 0
      %3018 = vmatpush1.bf16.msra.mxu0 %v2925
      %3019 = vmatprep.subr.bf16.mxu0 0
      %3020 = vmatpush1.bf16.msra.mxu0 %v2926
      %3021 = vmatprep.subr.bf16.mxu0 0
      %3022 = vmatpush1.bf16.msra.mxu0 %v2927
      %3023 = vmatprep.subr.bf16.mxu0 0
      %3024 = vmatpush1.bf16.msra.mxu0 %v2928
      %3025 = vmatprep.subr.bf16.mxu0 0
      %3026 = vmatpush1.bf16.msra.mxu0 %v2929
      %3027 = vmatprep.subr.bf16.mxu0 0
      %3028 = vmatpush1.bf16.msra.mxu0 %v2930
      %3029 = vmatprep.subr.bf16.mxu0 0
      %3030 = vmatpush1.bf16.msra.mxu0 %v2931
      %3031 = vmatprep.subr.bf16.mxu0 0
      %3032 = vmatpush1.bf16.msra.mxu0 %v2932
      %3033 = vmatprep.subr.bf16.mxu0 0
      %3034 = vmatpush1.bf16.msra.mxu0 %v2933
      %3035 = vmatprep.subr.bf16.mxu0 0
      %3036 = vmatpush1.bf16.msra.mxu0 %v2934
      %3037 = vmatprep.subr.bf16.mxu0 0
      %3038 = vmatpush1.bf16.msra.mxu0 %v2935
      %3039 = vmatprep.subr.bf16.mxu0 0
      %3040 = vmatpush1.bf16.msra.mxu0 %v2936
      %3041 = vmatprep.mubr.bf16.mxu0 %v2712
      %3042 = vmatmul.mubr.bf16.gmra.mrb[0].mxu0 %v2711
      %v3043 = vpop.f32.mrb[0].mxu0
      %v3044 = vadd.f32 %v3004, %v3043
      %v3045 = vpop.f32.mrb[0].mxu0
      %v3046 = vpop.f32.mrb[0].mxu0
      %v3047 = vpop.f32.mrb[0].mxu0
      %3048 = vdwg.mxu0
      %v3049 = vrot.slane %v3044, 4
      %v3050 = vadd.f32 %v3044, %v3049
      %v3051 = vrot.slane %v3050, 2
      %v3052 = vadd.f32 %v3050, %v3051
      %v3053 = vrot.slane %v3052, 1
      %v3054 = vadd.f32 %v3052, %v3053
      %v3055 = vmul.f32 %v3054, 0.125
      %v3056 = vmul.f32 %v3044, %v3044
      %v3057 = vrot.slane %v3056, 4
      %v3058 = vadd.f32 %v3056, %v3057
      %v3059 = vrot.slane %v3058, 2
      %v3060 = vadd.f32 %v3058, %v3059
      %v3061 = vrot.slane %v3060, 1
      %v3062 = vadd.f32 %v3060, %v3061
      %v3063 = vmul.f32 %v3062, 0.125
      %v3064 = vmul.f32 %v3055, %v3055
      %v3065 = vsub.f32 %v3063, %v3064
      %v3066 = vmax.f32 %v3065, 0.0
      %v3067 = vld [vmem:[#allocation14] sm:$0x1]
      %v3068 = vadd.f32 %v3066, 1e-05
      %v3069 = vrsqrt.pop %v3068
      %v3070 = vmul.f32 %v3067, %v3069
      %v3071 = vld [vmem:[#allocation16] sm:$0x1]
      %v3072 = vmul.f32 %v3055, %v3070
      %v3073 = vsub.f32 %v3071, %v3072
      %v3075 = vlaneseq
      %v3076 = vshrl.u32 %v3075, 7
      %v3077 = vsub.s32 0, %v3076
      %v3078 = vrot.slane %v3070, %v3077
      %v3080 = vmul.f32 %v3044, %v3078
      %v3082 = vlaneseq
      %v3083 = vshrl.u32 %v3082, 7
      %v3084 = vsub.s32 0, %v3083
      %v3085 = vrot.slane %v3073, %v3084
      %v3087 = vadd.f32 %v3080, %v3085
      %v3088 = vmax.f32 %v3087, 0.0
      %v3089 = vpack.c.bf16 %v3088, %v3088
      %v3090 = vld [vmem:[#allocation17] sm:$0xf]
      %v3091 = vld [vmem:[#allocation17 + $0x4] sm:$0xf]
      %v3092 = vld [vmem:[#allocation17 + $0x8] sm:$0xf]
      %v3093 = vld [vmem:[#allocation17 + $0xc] sm:$0xf]
      %v3094 = vld [vmem:[#allocation17 + $0x10] sm:$0xf]
      %v3095 = vld [vmem:[#allocation17 + $0x14] sm:$0xf]
      %v3096 = vld [vmem:[#allocation17 + $0x18] sm:$0xf]
      %v3097 = vld [vmem:[#allocation17 + $0x1c] sm:$0xf]
      %v3098 = vld [vmem:[#allocation17 + $0x20] sm:$0xf]
      %v3099 = vld [vmem:[#allocation17 + $0x24] sm:$0xf]
      %v3100 = vld [vmem:[#allocation17 + $0x28] sm:$0xf]
      %v3101 = vld [vmem:[#allocation17 + $0x2c] sm:$0xf]
      %v3102 = vld [vmem:[#allocation17 + $0x30] sm:$0xf]
      %v3103 = vld [vmem:[#allocation17 + $0x34] sm:$0xf]
      %v3104 = vld [vmem:[#allocation17 + $0x38] sm:$0xf]
      %v3105 = vld [vmem:[#allocation17 + $0x3c] sm:$0xf]
      %v3106 = vld [vmem:[#allocation19] sm:$0x1]
      %v3108 = vlaneseq
      %v3109 = vshrl.u32 %v3108, 7
      %v3110 = vsub.s32 0, %v3109
      %v3111 = vrot.slane %v3106, %v3110
      %v3129 = vunpack.c.l.b16 %v3090
      %v3130 = vunpack.c.l.b16 %v3091
      %v3131 = vunpack.c.l.b16 %v3092
      %v3132 = vunpack.c.l.b16 %v3093
      %v3133 = vunpack.c.l.b16 %v3094
      %v3134 = vunpack.c.l.b16 %v3095
      %v3135 = vunpack.c.l.b16 %v3096
      %v3136 = vunpack.c.l.b16 %v3097
      %v3137 = vunpack.c.l.b16 %v3098
      %v3138 = vunpack.c.l.b16 %v3099
      %v3139 = vunpack.c.l.b16 %v3100
      %v3140 = vunpack.c.l.b16 %v3101
      %v3141 = vunpack.c.l.b16 %v3102
      %v3142 = vunpack.c.l.b16 %v3103
      %v3143 = vunpack.c.l.b16 %v3104
      %v3144 = vunpack.c.l.b16 %v3105
      %v3145 = vpack.c.b16 %v3130, %v3129
      %v3146 = vpack.c.b16 %v3132, %v3131
      %v3147 = vpack.c.b16 %v3134, %v3133
      %v3148 = vpack.c.b16 %v3136, %v3135
      %v3149 = vpack.c.b16 %v3138, %v3137
      %v3150 = vpack.c.b16 %v3140, %v3139
      %v3151 = vpack.c.b16 %v3142, %v3141
      %v3152 = vpack.c.b16 %v3144, %v3143
      %3161 = vmatprep.subr.bf16.mxu0 0
      %3162 = vmatpush1.bf16.msra.mxu0 %v3145
      %3163 = vmatprep.subr.bf16.mxu0 0
      %3164 = vmatpush1.bf16.msra.mxu0 %v3146
      %3165 = vmatprep.subr.bf16.mxu0 0
      %3166 = vmatpush1.bf16.msra.mxu0 %v3147
      %3167 = vmatprep.subr.bf16.mxu0 0
      %3168 = vmatpush1.bf16.msra.mxu0 %v3148
      %3169 = vmatprep.subr.bf16.mxu0 0
      %3170 = vmatpush1.bf16.msra.mxu0 %v3149
      %3171 = vmatprep.subr.bf16.mxu0 0
      %3172 = vmatpush1.bf16.msra.mxu0 %v3150
      %3173 = vmatprep.subr.bf16.mxu0 0
      %3174 = vmatpush1.bf16.msra.mxu0 %v3151
      %3175 = vmatprep.subr.bf16.mxu0 0
      %3176 = vmatpush1.bf16.msra.mxu0 %v3152
      %3177 = vmatprep.subr.bf16.mxu0 0
      %3178 = vmatpush1.bf16.msra.mxu0 0
      %3179 = vmatprep.subr.bf16.mxu0 0
      %3180 = vmatpush1.bf16.msra.mxu0 0
      %3181 = vmatprep.subr.bf16.mxu0 0
      %3182 = vmatpush1.bf16.msra.mxu0 0
      %3183 = vmatprep.subr.bf16.mxu0 0
      %3184 = vmatpush1.bf16.msra.mxu0 0
      %3185 = vmatprep.subr.bf16.mxu0 0
      %3186 = vmatpush1.bf16.msra.mxu0 0
      %3187 = vmatprep.subr.bf16.mxu0 0
      %3188 = vmatpush1.bf16.msra.mxu0 0
      %3189 = vmatprep.subr.bf16.mxu0 0
      %3190 = vmatpush1.bf16.msra.mxu0 0
      %3191 = vmatprep.subr.bf16.mxu0 0
      %3192 = vmatpush1.bf16.msra.mxu0 0
      %3193 = vmatprep.mubr.bf16.mxu0 0
      %3194 = vmatmul.mubr.bf16.gmra.mrb[0].mxu0 %v3089
      %v3195 = vpop.f32.mrb[0].mxu0
      %v3196 = vadd.f32 %v3111, %v3195
      %v3197 = vpop.f32.mrb[0].mxu0
      %v3198 = vpop.f32.mrb[0].mxu0
      %v3199 = vpop.f32.mrb[0].mxu0
      %3200 = vdwg.mxu0
      %3201 = vst [vmem:[#allocation20] sm:$0xff] %v3196
    $region81: #{tpu_custom_call.1} parent=1 // pred_fallthru
      _
    // Predicated region
    $region82: #{tpu_custom_call.1} parent=1 // pred_check
      _
    $region83: #{tpu_custom_call.1} parent=1 // pred_check_branch
      %3203 = sbr.rel (0) target = $region85
    $region84: #{tpu_custom_call.1} parent=1 // pred_region
      %s3205 = ssub.s32 128, 128
      %3206 = vsyncadd [#allocation7], %s3205
      %s3208 = sshll.u32 [#allocation20], 4
      %s3209 = int_to_ptr.vmem [resolvable:$true] %s3208
      %3211 = dma.vmem_to_hbm [thread:$0]  %s3209, 128, %s9, [#allocation7]
    $region85: #{tpu_custom_call.1} parent=1 // pred_fallthru
      _
    // Predicated region
    $region86: #{tpu_custom_call.1} parent=1 // pred_check
      _
    $region87: #{tpu_custom_call.1} parent=1 // pred_check_branch
      %3213 = sbr.rel (0) target = $region89
    $region88: #{tpu_custom_call.1} parent=1 // pred_region
      %3214 = dma.done [#allocation7], 128
    $region89: #{tpu_custom_call.1} parent=1 // pred_fallthru
      _
    %3215 = vsyncpa [#allocation6], 1
    %3216 = vsyncpa [#allocation9], 1
    %3217 = vsyncpa [#allocation12], 1
    %3218 = vsyncpa [#allocation15], 1
    %3219 = vsyncpa [#allocation18], 1
    %3220 = vsyncpa [#allocation7], 1

</llo_original>
